<compile_context>
chip_gen: v7x
topology: tpu7x:2x2x1
jax: 0.10.0
libtpu: 0.0.40
codegen_flags: <defaults>
</compile_context>

<pallas_src>
import jax
import jax.numpy as jnp
from jax.experimental import pallas as pl
from jax.experimental.pallas import tpu as pltpu


def _spatial_attention_kernel(x_ref, t_ref, o_ref, maps_ref):
    # x_ref   : (1, CB, H, W)   one channel-block of one batch element
    # t_ref   : (2, K, Wp, W)   banded-Toeplitz conv weights (f32, 1/C folded in)
    # o_ref   : (1, 1, H, W)    output attention map
    # maps_ref: (2, Hp, Wp) f32 zero-padded running [channel-sum, channel-max]
    c_idx = pl.program_id(1)
    n_c = pl.num_programs(1)

    cb = x_ref.shape[1]
    H, W = o_ref.shape[2], o_ref.shape[3]
    K = t_ref.shape[1]
    pad = (K - 1) // 2

    # ---- partial channel reduction for this block: one plane at a time, so
    #      only two (H, W) f32 maps stay live (no C*H*W f32 temporary). ------
    blk_sum = x_ref[0, 0].astype(jnp.float32)            # (H, W)
    blk_max = blk_sum
    for i in range(1, cb):
        plane = x_ref[0, i].astype(jnp.float32)
        blk_sum = blk_sum + plane
        blk_max = jnp.maximum(blk_max, plane)

    # ---- fold into the running accumulators; the scratch borders stay zero,
    #      which is exactly nn.Conv2d's zero padding for the (avg,max) maps. --
    @pl.when(c_idx == 0)
    def _init():
        maps_ref[...] = jnp.zeros_like(maps_ref)
        maps_ref[0, pad:pad + H, pad:pad + W] = blk_sum
        maps_ref[1, pad:pad + H, pad:pad + W] = blk_max

    @pl.when(c_idx > 0)
    def _update():
        maps_ref[0, pad:pad + H, pad:pad + W] += blk_sum
        maps_ref[1, pad:pad + H, pad:pad + W] = jnp.maximum(
            maps_ref[1, pad:pad + H, pad:pad + W], blk_max)

    # ---- last channel step: 7x7 conv as 2*K MXU matmuls + EUP sigmoid. -----
    @pl.when(c_idx == n_c - 1)
    def _finalize():
        acc = jnp.zeros((H, W), jnp.float32)
        for ci in range(2):                      # ci=0: sum(->mean) map, ci=1: max map
            for ky in range(K):
                slab = maps_ref[ci, ky:ky + H, :]              # (H, Wp)
                acc = acc + jnp.dot(slab, t_ref[ci, ky],        # (Wp, W)
                                    preferred_element_type=jnp.float32)
        sig = pl.reciprocal(1.0 + jnp.exp(-acc), approx=True)   # EUP recip
        o_ref[0, 0] = sig.astype(o_ref.dtype)


def _pick_c_block(C, c_block):
    cb = min(C, 64) if c_block is None else max(1, min(c_block, C))
    while C % cb:        # shrink to a divisor of C (block padding would corrupt max)
        cb -= 1
    return cb


def _toeplitz_weights(weight, n_channels, width, pad):
    """(1,2,K,K) conv weight -> (2,K,Wp,W) banded-Toeplitz slabs.

    T[c,ky,p,j] = w[c,ky,p-j] if 0 <= p-j < K else 0, with the channel-mean's
    1/C folded into the avg-channel (c=0) taps so the kernel can use a SUM map.
    """
    k = weight.shape[-1]
    wp = width + 2 * pad
    w = weight[0].astype(jnp.float32)                       # (2, K, K)
    w = w.at[0].multiply(1.0 / n_channels)
    d = jnp.arange(wp)[:, None] - jnp.arange(width)[None, :]    # (Wp, W)
    valid = (d >= 0) & (d < k)
    taps = w[:, :, jnp.clip(d, 0, k - 1)]                   # (2, K, Wp, W)
    return taps * valid[None, None].astype(jnp.float32)


def spatial_attention(x, weight, kernel_size=7, c_block=None):
    """x: (N, C, H, W); weight: (1, 2, k, k), no bias. Returns (N, 1, H, W)."""
    assert kernel_size in (3, 7), "kernel size must be 3 or 7"
    pad = 3 if kernel_size == 7 else 1
    N, C, H, W = x.shape
    assert weight.shape == (1, 2, kernel_size, kernel_size)
    Hp, Wp = H + 2 * pad, W + 2 * pad

    cb = _pick_c_block(C, c_block)
    t = _toeplitz_weights(weight, C, W, pad)                # (2, K, Wp, W) f32

    # Rough per-step VMEM need (double-buffered input/output + weights +
    # accumulator scratch); raise the scoped limit only as blocks grow.
    itemsize = x.dtype.itemsize
    vmem_need = (2 * cb * H * W * itemsize      # input block, 2 pipeline buffers
                 + 2 * t.size * 4               # Toeplitz slabs
                 + 2 * H * W * itemsize         # output block, 2 buffers
                 + 2 * Hp * Wp * 4)             # maps scratch
    vmem_limit = int(max(32 * 1024 * 1024, 2 * vmem_need))

    grid_spec = pltpu.PrefetchScalarGridSpec(
        num_scalar_prefetch=0,
        grid=(N, C // cb),                      # (parallel batch, C reduction)
        in_specs=[
            pl.BlockSpec((1, cb, H, W), lambda n, c: (n, c, 0, 0)),
            pl.BlockSpec((2, kernel_size, Wp, W), lambda n, c: (0, 0, 0, 0)),
        ],
        out_specs=pl.BlockSpec((1, 1, H, W), lambda n, c: (n, 0, 0, 0)),
        scratch_shapes=[pltpu.VMEM((2, Hp, Wp), jnp.float32)],
    )

    return pl.pallas_call(
        _spatial_attention_kernel,
        out_shape=jax.ShapeDtypeStruct((N, 1, H, W), x.dtype),
        grid_spec=grid_spec,
        compiler_params=pltpu.CompilerParams(
            dimension_semantics=("parallel", "arbitrary"),
            vmem_limit_bytes=vmem_limit),
    )(x, t)


def _reference(x, weight, kernel_size=7):
    """Pure-JAX reference matching the PyTorch forward (exact f32 conv)."""
    pad = 3 if kernel_size == 7 else 1
    avg_out = jnp.mean(x, axis=1, keepdims=True)
    max_out = jnp.max(x, axis=1, keepdims=True)
    cat = jnp.concatenate([avg_out, max_out], axis=1)        # (N, 2, H, W)
    y = jax.lax.conv_general_dilated(
        cat, weight, window_strides=(1, 1),
        padding=((pad, pad), (pad, pad)),
        dimension_numbers=("NCHW", "OIHW", "NCHW"),
        precision=jax.lax.Precision.HIGHEST)
    return jax.nn.sigmoid(y)


if __name__ == "__main__":
    key = jax.random.PRNGKey(0)
    k_x, k_w = jax.random.split(key)

    N, C, H, W = 2, 4, 16, 16
    ksize = 7
    x = jax.random.normal(k_x, (N, C, H, W), dtype=jnp.float32)
    # Deterministic conv weight, shape (out=1, in=2, k, k), no bias.
    weight = jax.random.normal(k_w, (1, 2, ksize, ksize), dtype=jnp.float32) * 0.1

    # c_block=2 so the channel-reduction grid axis takes >1 step on the toy size.
    out = spatial_attention(x, weight, kernel_size=ksize, c_block=2)
    out = jax.block_until_ready(out)

    ref = _reference(x, weight, kernel_size=ksize)
    assert out.shape == (N, 1, H, W)
    # Tolerance: the in-kernel conv runs on the MXU (f32 operands may use the
    # bf16-pass path at default matmul precision) and the sigmoid uses the EUP
    # approx reciprocal, so allow ~2e-3 on the [0,1] output.
    assert jnp.allclose(out, ref, rtol=2e-3, atol=2e-3), "mismatch vs reference"

    print("KERNEL_OK")
</pallas_src>

<mosaic_0001>
module attributes {stable_mosaic.version = 11 : i64} {
  func.func @_spatial_attention_kernel(%arg0: i32, %arg1: i32, %arg2: memref<1x2x16x16xf32, #tpu.memory_space<vmem>>, %arg3: memref<2x7x22x16xf32, #tpu.memory_space<vmem>>, %arg4: memref<1x1x16x16xf32, #tpu.memory_space<vmem>>, %arg5: memref<2x22x22xf32, #tpu.memory_space<vmem>>) attributes {dimension_semantics = [#tpu.dimension_semantics<parallel>, #tpu.dimension_semantics<arbitrary>], iteration_bounds = array<i64: 2, 2>, scalar_prefetch = 0 : i64, scratch_operands = 1 : i64, tpu.core_type = #tpu.core_type<tc>, window_params = [{transform_indices = @transform_0, window_bounds = array<i64: 1, 2, 16, 16>}, {pipeline_mode = #tpu.pipeline_mode<synchronous>, transform_indices = @transform_1, window_bounds = array<i64: 2, 7, 22, 16>}, {transform_indices = @transform_2, window_bounds = array<i64: 1, 1, 16, 16>}]} {
    %c0 = arith.constant 0 : index
    %c0_0 = arith.constant 0 : index
    %c0_1 = arith.constant 0 : index
    %c0_2 = arith.constant 0 : index
    %0 = vector.load %arg2[%c0, %c0_0, %c0_1, %c0_2] : memref<1x2x16x16xf32, #tpu.memory_space<vmem>>, vector<1x1x16x16xf32>
    %1 = vector.shape_cast %0 : vector<1x1x16x16xf32> to vector<16x16xf32>
    %c0_3 = arith.constant 0 : index
    %c1 = arith.constant 1 : index
    %c0_4 = arith.constant 0 : index
    %c0_5 = arith.constant 0 : index
    %2 = vector.load %arg2[%c0_3, %c1, %c0_4, %c0_5] : memref<1x2x16x16xf32, #tpu.memory_space<vmem>>, vector<1x1x16x16xf32>
    %3 = vector.shape_cast %2 : vector<1x1x16x16xf32> to vector<16x16xf32>
    %4 = arith.addf %1, %3 : vector<16x16xf32>
    %5 = arith.maximumf %1, %3 : vector<16x16xf32>
    %c0_i32 = arith.constant 0 : i32
    %6 = arith.cmpi eq, %arg1, %c0_i32 : i32
    %7 = arith.extui %6 : i1 to i32
    %c0_i32_6 = arith.constant 0 : i32
    %8 = arith.cmpi ne, %7, %c0_i32_6 : i32
    scf.if %8 {
      %cst = arith.constant 0.000000e+00 : f32
      %15 = vector.broadcast %cst : f32 to vector<2x22x22xf32>
      %c0_10 = arith.constant 0 : index
      %c0_11 = arith.constant 0 : index
      %c0_12 = arith.constant 0 : index
      %16 = vector.load %arg5[%c0_10, %c0_11, %c0_12] : memref<2x22x22xf32, #tpu.memory_space<vmem>>, vector<2x22x22xf32>
      tpu.vector_store %arg5[%c0_10, %c0_11, %c0_12], %15 {strides = array<i32>} : memref<2x22x22xf32, #tpu.memory_space<vmem>>, vector<2x22x22xf32>,
      %c0_13 = arith.constant 0 : index
      %c3 = arith.constant 3 : index
      %c3_14 = arith.constant 3 : index
      %17 = vector.load %arg5[%c0_13, %c3, %c3_14] : memref<2x22x22xf32, #tpu.memory_space<vmem>>, vector<1x16x16xf32>
      %18 = vector.shape_cast %17 : vector<1x16x16xf32> to vector<16x16xf32>
      %19 = vector.shape_cast %4 : vector<16x16xf32> to vector<1x16x16xf32>
      tpu.vector_store %arg5[%c0_13, %c3, %c3_14], %19 {strides = array<i32>} : memref<2x22x22xf32, #tpu.memory_space<vmem>>, vector<1x16x16xf32>,
      %c1_15 = arith.constant 1 : index
      %c3_16 = arith.constant 3 : index
      %c3_17 = arith.constant 3 : index
      %20 = vector.load %arg5[%c1_15, %c3_16, %c3_17] : memref<2x22x22xf32, #tpu.memory_space<vmem>>, vector<1x16x16xf32>
      %21 = vector.shape_cast %20 : vector<1x16x16xf32> to vector<16x16xf32>
      %22 = vector.shape_cast %5 : vector<16x16xf32> to vector<1x16x16xf32>
      tpu.vector_store %arg5[%c1_15, %c3_16, %c3_17], %22 {strides = array<i32>} : memref<2x22x22xf32, #tpu.memory_space<vmem>>, vector<1x16x16xf32>,
    } else {
    }
    %c0_i32_7 = arith.constant 0 : i32
    %9 = arith.cmpi sgt, %arg1, %c0_i32_7 : i32
    %10 = arith.extui %9 : i1 to i32
    %c0_i32_8 = arith.constant 0 : i32
    %11 = arith.cmpi ne, %10, %c0_i32_8 : i32
    scf.if %11 {
      %c0_10 = arith.constant 0 : index
      %c3 = arith.constant 3 : index
      %c3_11 = arith.constant 3 : index
      %15 = vector.load %arg5[%c0_10, %c3, %c3_11] : memref<2x22x22xf32, #tpu.memory_space<vmem>>, vector<1x16x16xf32>
      %16 = vector.shape_cast %15 : vector<1x16x16xf32> to vector<16x16xf32>
      %17 = arith.addf %16, %4 : vector<16x16xf32>
      %c0_12 = arith.constant 0 : index
      %c3_13 = arith.constant 3 : index
      %c3_14 = arith.constant 3 : index
      %18 = vector.load %arg5[%c0_12, %c3_13, %c3_14] : memref<2x22x22xf32, #tpu.memory_space<vmem>>, vector<1x16x16xf32>
      %19 = vector.shape_cast %18 : vector<1x16x16xf32> to vector<16x16xf32>
      %20 = vector.shape_cast %17 : vector<16x16xf32> to vector<1x16x16xf32>
      tpu.vector_store %arg5[%c0_12, %c3_13, %c3_14], %20 {strides = array<i32>} : memref<2x22x22xf32, #tpu.memory_space<vmem>>, vector<1x16x16xf32>,
      %c1_15 = arith.constant 1 : index
      %c3_16 = arith.constant 3 : index
      %c3_17 = arith.constant 3 : index
      %21 = vector.load %arg5[%c1_15, %c3_16, %c3_17] : memref<2x22x22xf32, #tpu.memory_space<vmem>>, vector<1x16x16xf32>
      %22 = vector.shape_cast %21 : vector<1x16x16xf32> to vector<16x16xf32>
      %23 = arith.maximumf %22, %5 : vector<16x16xf32>
      %c1_18 = arith.constant 1 : index
      %c3_19 = arith.constant 3 : index
      %c3_20 = arith.constant 3 : index
      %24 = vector.load %arg5[%c1_18, %c3_19, %c3_20] : memref<2x22x22xf32, #tpu.memory_space<vmem>>, vector<1x16x16xf32>
      %25 = vector.shape_cast %24 : vector<1x16x16xf32> to vector<16x16xf32>
      %26 = vector.shape_cast %23 : vector<16x16xf32> to vector<1x16x16xf32>
      tpu.vector_store %arg5[%c1_18, %c3_19, %c3_20], %26 {strides = array<i32>} : memref<2x22x22xf32, #tpu.memory_space<vmem>>, vector<1x16x16xf32>,
    } else {
    }
    %c1_i32 = arith.constant 1 : i32
    %12 = arith.cmpi eq, %arg1, %c1_i32 : i32
    %13 = arith.extui %12 : i1 to i32
    %c0_i32_9 = arith.constant 0 : i32
    %14 = arith.cmpi ne, %13, %c0_i32_9 : i32
    scf.if %14 {
      %cst = arith.constant 0.000000e+00 : f32
      %15 = vector.broadcast %cst : f32 to vector<16x16xf32>
      %c0_10 = arith.constant 0 : index
      %c0_11 = arith.constant 0 : index
      %c0_12 = arith.constant 0 : index
      %16 = vector.load %arg5[%c0_10, %c0_11, %c0_12] : memref<2x22x22xf32, #tpu.memory_space<vmem>>, vector<1x16x22xf32>
      %17 = vector.shape_cast %16 : vector<1x16x22xf32> to vector<16x22xf32>
      %c0_13 = arith.constant 0 : index
      %c0_14 = arith.constant 0 : index
      %c0_15 = arith.constant 0 : index
      %c0_16 = arith.constant 0 : index
      %18 = vector.load %arg3[%c0_13, %c0_14, %c0_15, %c0_16] : memref<2x7x22x16xf32, #tpu.memory_space<vmem>>, vector<1x1x22x16xf32>
      %19 = vector.shape_cast %18 : vector<1x1x22x16xf32> to vector<22x16xf32>
      %cst_17 = arith.constant dense<0.000000e+00> : vector<16x16xf32>
      %20 = tpu.matmul %17, %19, %cst_17 {dimension_numbers = #tpu.dot_dimension_numbers<[1], [0], [0], [1], [0, 0, 1, 1], [], []>} : vector<16x22xf32>, vector<22x16xf32>, vector<16x16xf32> -> vector<16x16xf32>
      %21 = arith.addf %15, %20 : vector<16x16xf32>
      %c0_18 = arith.constant 0 : index
      %c1_19 = arith.constant 1 : index
      %c0_20 = arith.constant 0 : index
      %22 = vector.load %arg5[%c0_18, %c1_19, %c0_20] : memref<2x22x22xf32, #tpu.memory_space<vmem>>, vector<1x16x22xf32>
      %23 = vector.shape_cast %22 : vector<1x16x22xf32> to vector<16x22xf32>
      %c0_21 = arith.constant 0 : index
      %c1_22 = arith.constant 1 : index
      %c0_23 = arith.constant 0 : index
      %c0_24 = arith.constant 0 : index
      %24 = vector.load %arg3[%c0_21, %c1_22, %c0_23, %c0_24] : memref<2x7x22x16xf32, #tpu.memory_space<vmem>>, vector<1x1x22x16xf32>
      %25 = vector.shape_cast %24 : vector<1x1x22x16xf32> to vector<22x16xf32>
      %cst_25 = arith.constant dense<0.000000e+00> : vector<16x16xf32>
      %26 = tpu.matmul %23, %25, %cst_25 {dimension_numbers = #tpu.dot_dimension_numbers<[1], [0], [0], [1], [0, 0, 1, 1], [], []>} : vector<16x22xf32>, vector<22x16xf32>, vector<16x16xf32> -> vector<16x16xf32>
      %27 = arith.addf %21, %26 : vector<16x16xf32>
      %c0_26 = arith.constant 0 : index
      %c2 = arith.constant 2 : index
      %c0_27 = arith.constant 0 : index
      %28 = vector.load %arg5[%c0_26, %c2, %c0_27] : memref<2x22x22xf32, #tpu.memory_space<vmem>>, vector<1x16x22xf32>
      %29 = vector.shape_cast %28 : vector<1x16x22xf32> to vector<16x22xf32>
      %c0_28 = arith.constant 0 : index
      %c2_29 = arith.constant 2 : index
      %c0_30 = arith.constant 0 : index
      %c0_31 = arith.constant 0 : index
      %30 = vector.load %arg3[%c0_28, %c2_29, %c0_30, %c0_31] : memref<2x7x22x16xf32, #tpu.memory_space<vmem>>, vector<1x1x22x16xf32>
      %31 = vector.shape_cast %30 : vector<1x1x22x16xf32> to vector<22x16xf32>
      %cst_32 = arith.constant dense<0.000000e+00> : vector<16x16xf32>
      %32 = tpu.matmul %29, %31, %cst_32 {dimension_numbers = #tpu.dot_dimension_numbers<[1], [0], [0], [1], [0, 0, 1, 1], [], []>} : vector<16x22xf32>, vector<22x16xf32>, vector<16x16xf32> -> vector<16x16xf32>
      %33 = arith.addf %27, %32 : vector<16x16xf32>
      %c0_33 = arith.constant 0 : index
      %c3 = arith.constant 3 : index
      %c0_34 = arith.constant 0 : index
      %34 = vector.load %arg5[%c0_33, %c3, %c0_34] : memref<2x22x22xf32, #tpu.memory_space<vmem>>, vector<1x16x22xf32>
      %35 = vector.shape_cast %34 : vector<1x16x22xf32> to vector<16x22xf32>
      %c0_35 = arith.constant 0 : index
      %c3_36 = arith.constant 3 : index
      %c0_37 = arith.constant 0 : index
      %c0_38 = arith.constant 0 : index
      %36 = vector.load %arg3[%c0_35, %c3_36, %c0_37, %c0_38] : memref<2x7x22x16xf32, #tpu.memory_space<vmem>>, vector<1x1x22x16xf32>
      %37 = vector.shape_cast %36 : vector<1x1x22x16xf32> to vector<22x16xf32>
      %cst_39 = arith.constant dense<0.000000e+00> : vector<16x16xf32>
      %38 = tpu.matmul %35, %37, %cst_39 {dimension_numbers = #tpu.dot_dimension_numbers<[1], [0], [0], [1], [0, 0, 1, 1], [], []>} : vector<16x22xf32>, vector<22x16xf32>, vector<16x16xf32> -> vector<16x16xf32>
      %39 = arith.addf %33, %38 : vector<16x16xf32>
      %c0_40 = arith.constant 0 : index
      %c4 = arith.constant 4 : index
      %c0_41 = arith.constant 0 : index
      %40 = vector.load %arg5[%c0_40, %c4, %c0_41] : memref<2x22x22xf32, #tpu.memory_space<vmem>>, vector<1x16x22xf32>
      %41 = vector.shape_cast %40 : vector<1x16x22xf32> to vector<16x22xf32>
      %c0_42 = arith.constant 0 : index
      %c4_43 = arith.constant 4 : index
      %c0_44 = arith.constant 0 : index
      %c0_45 = arith.constant 0 : index
      %42 = vector.load %arg3[%c0_42, %c4_43, %c0_44, %c0_45] : memref<2x7x22x16xf32, #tpu.memory_space<vmem>>, vector<1x1x22x16xf32>
      %43 = vector.shape_cast %42 : vector<1x1x22x16xf32> to vector<22x16xf32>
      %cst_46 = arith.constant dense<0.000000e+00> : vector<16x16xf32>
      %44 = tpu.matmul %41, %43, %cst_46 {dimension_numbers = #tpu.dot_dimension_numbers<[1], [0], [0], [1], [0, 0, 1, 1], [], []>} : vector<16x22xf32>, vector<22x16xf32>, vector<16x16xf32> -> vector<16x16xf32>
      %45 = arith.addf %39, %44 : vector<16x16xf32>
      %c0_47 = arith.constant 0 : index
      %c5 = arith.constant 5 : index
      %c0_48 = arith.constant 0 : index
      %46 = vector.load %arg5[%c0_47, %c5, %c0_48] : memref<2x22x22xf32, #tpu.memory_space<vmem>>, vector<1x16x22xf32>
      %47 = vector.shape_cast %46 : vector<1x16x22xf32> to vector<16x22xf32>
      %c0_49 = arith.constant 0 : index
      %c5_50 = arith.constant 5 : index
      %c0_51 = arith.constant 0 : index
      %c0_52 = arith.constant 0 : index
      %48 = vector.load %arg3[%c0_49, %c5_50, %c0_51, %c0_52] : memref<2x7x22x16xf32, #tpu.memory_space<vmem>>, vector<1x1x22x16xf32>
      %49 = vector.shape_cast %48 : vector<1x1x22x16xf32> to vector<22x16xf32>
      %cst_53 = arith.constant dense<0.000000e+00> : vector<16x16xf32>
      %50 = tpu.matmul %47, %49, %cst_53 {dimension_numbers = #tpu.dot_dimension_numbers<[1], [0], [0], [1], [0, 0, 1, 1], [], []>} : vector<16x22xf32>, vector<22x16xf32>, vector<16x16xf32> -> vector<16x16xf32>
      %51 = arith.addf %45, %50 : vector<16x16xf32>
      %c0_54 = arith.constant 0 : index
      %c6 = arith.constant 6 : index
      %c0_55 = arith.constant 0 : index
      %52 = vector.load %arg5[%c0_54, %c6, %c0_55] : memref<2x22x22xf32, #tpu.memory_space<vmem>>, vector<1x16x22xf32>
      %53 = vector.shape_cast %52 : vector<1x16x22xf32> to vector<16x22xf32>
      %c0_56 = arith.constant 0 : index
      %c6_57 = arith.constant 6 : index
      %c0_58 = arith.constant 0 : index
      %c0_59 = arith.constant 0 : index
      %54 = vector.load %arg3[%c0_56, %c6_57, %c0_58, %c0_59] : memref<2x7x22x16xf32, #tpu.memory_space<vmem>>, vector<1x1x22x16xf32>
      %55 = vector.shape_cast %54 : vector<1x1x22x16xf32> to vector<22x16xf32>
      %cst_60 = arith.constant dense<0.000000e+00> : vector<16x16xf32>
      %56 = tpu.matmul %53, %55, %cst_60 {dimension_numbers = #tpu.dot_dimension_numbers<[1], [0], [0], [1], [0, 0, 1, 1], [], []>} : vector<16x22xf32>, vector<22x16xf32>, vector<16x16xf32> -> vector<16x16xf32>
      %57 = arith.addf %51, %56 : vector<16x16xf32>
      %c1_61 = arith.constant 1 : index
      %c0_62 = arith.constant 0 : index
      %c0_63 = arith.constant 0 : index
      %58 = vector.load %arg5[%c1_61, %c0_62, %c0_63] : memref<2x22x22xf32, #tpu.memory_space<vmem>>, vector<1x16x22xf32>
      %59 = vector.shape_cast %58 : vector<1x16x22xf32> to vector<16x22xf32>
      %c1_64 = arith.constant 1 : index
      %c0_65 = arith.constant 0 : index
      %c0_66 = arith.constant 0 : index
      %c0_67 = arith.constant 0 : index
      %60 = vector.load %arg3[%c1_64, %c0_65, %c0_66, %c0_67] : memref<2x7x22x16xf32, #tpu.memory_space<vmem>>, vector<1x1x22x16xf32>
      %61 = vector.shape_cast %60 : vector<1x1x22x16xf32> to vector<22x16xf32>
      %cst_68 = arith.constant dense<0.000000e+00> : vector<16x16xf32>
      %62 = tpu.matmul %59, %61, %cst_68 {dimension_numbers = #tpu.dot_dimension_numbers<[1], [0], [0], [1], [0, 0, 1, 1], [], []>} : vector<16x22xf32>, vector<22x16xf32>, vector<16x16xf32> -> vector<16x16xf32>
      %63 = arith.addf %57, %62 : vector<16x16xf32>
      %c1_69 = arith.constant 1 : index
      %c1_70 = arith.constant 1 : index
      %c0_71 = arith.constant 0 : index
      %64 = vector.load %arg5[%c1_69, %c1_70, %c0_71] : memref<2x22x22xf32, #tpu.memory_space<vmem>>, vector<1x16x22xf32>
      %65 = vector.shape_cast %64 : vector<1x16x22xf32> to vector<16x22xf32>
      %c1_72 = arith.constant 1 : index
      %c1_73 = arith.constant 1 : index
      %c0_74 = arith.constant 0 : index
      %c0_75 = arith.constant 0 : index
      %66 = vector.load %arg3[%c1_72, %c1_73, %c0_74, %c0_75] : memref<2x7x22x16xf32, #tpu.memory_space<vmem>>, vector<1x1x22x16xf32>
      %67 = vector.shape_cast %66 : vector<1x1x22x16xf32> to vector<22x16xf32>
      %cst_76 = arith.constant dense<0.000000e+00> : vector<16x16xf32>
      %68 = tpu.matmul %65, %67, %cst_76 {dimension_numbers = #tpu.dot_dimension_numbers<[1], [0], [0], [1], [0, 0, 1, 1], [], []>} : vector<16x22xf32>, vector<22x16xf32>, vector<16x16xf32> -> vector<16x16xf32>
      %69 = arith.addf %63, %68 : vector<16x16xf32>
      %c1_77 = arith.constant 1 : index
      %c2_78 = arith.constant 2 : index
      %c0_79 = arith.constant 0 : index
      %70 = vector.load %arg5[%c1_77, %c2_78, %c0_79] : memref<2x22x22xf32, #tpu.memory_space<vmem>>, vector<1x16x22xf32>
      %71 = vector.shape_cast %70 : vector<1x16x22xf32> to vector<16x22xf32>
      %c1_80 = arith.constant 1 : index
      %c2_81 = arith.constant 2 : index
      %c0_82 = arith.constant 0 : index
      %c0_83 = arith.constant 0 : index
      %72 = vector.load %arg3[%c1_80, %c2_81, %c0_82, %c0_83] : memref<2x7x22x16xf32, #tpu.memory_space<vmem>>, vector<1x1x22x16xf32>
      %73 = vector.shape_cast %72 : vector<1x1x22x16xf32> to vector<22x16xf32>
      %cst_84 = arith.constant dense<0.000000e+00> : vector<16x16xf32>
      %74 = tpu.matmul %71, %73, %cst_84 {dimension_numbers = #tpu.dot_dimension_numbers<[1], [0], [0], [1], [0, 0, 1, 1], [], []>} : vector<16x22xf32>, vector<22x16xf32>, vector<16x16xf32> -> vector<16x16xf32>
      %75 = arith.addf %69, %74 : vector<16x16xf32>
      %c1_85 = arith.constant 1 : index
      %c3_86 = arith.constant 3 : index
      %c0_87 = arith.constant 0 : index
      %76 = vector.load %arg5[%c1_85, %c3_86, %c0_87] : memref<2x22x22xf32, #tpu.memory_space<vmem>>, vector<1x16x22xf32>
      %77 = vector.shape_cast %76 : vector<1x16x22xf32> to vector<16x22xf32>
      %c1_88 = arith.constant 1 : index
      %c3_89 = arith.constant 3 : index
      %c0_90 = arith.constant 0 : index
      %c0_91 = arith.constant 0 : index
      %78 = vector.load %arg3[%c1_88, %c3_89, %c0_90, %c0_91] : memref<2x7x22x16xf32, #tpu.memory_space<vmem>>, vector<1x1x22x16xf32>
      %79 = vector.shape_cast %78 : vector<1x1x22x16xf32> to vector<22x16xf32>
      %cst_92 = arith.constant dense<0.000000e+00> : vector<16x16xf32>
      %80 = tpu.matmul %77, %79, %cst_92 {dimension_numbers = #tpu.dot_dimension_numbers<[1], [0], [0], [1], [0, 0, 1, 1], [], []>} : vector<16x22xf32>, vector<22x16xf32>, vector<16x16xf32> -> vector<16x16xf32>
      %81 = arith.addf %75, %80 : vector<16x16xf32>
      %c1_93 = arith.constant 1 : index
      %c4_94 = arith.constant 4 : index
      %c0_95 = arith.constant 0 : index
      %82 = vector.load %arg5[%c1_93, %c4_94, %c0_95] : memref<2x22x22xf32, #tpu.memory_space<vmem>>, vector<1x16x22xf32>
      %83 = vector.shape_cast %82 : vector<1x16x22xf32> to vector<16x22xf32>
      %c1_96 = arith.constant 1 : index
      %c4_97 = arith.constant 4 : index
      %c0_98 = arith.constant 0 : index
      %c0_99 = arith.constant 0 : index
      %84 = vector.load %arg3[%c1_96, %c4_97, %c0_98, %c0_99] : memref<2x7x22x16xf32, #tpu.memory_space<vmem>>, vector<1x1x22x16xf32>
      %85 = vector.shape_cast %84 : vector<1x1x22x16xf32> to vector<22x16xf32>
      %cst_100 = arith.constant dense<0.000000e+00> : vector<16x16xf32>
      %86 = tpu.matmul %83, %85, %cst_100 {dimension_numbers = #tpu.dot_dimension_numbers<[1], [0], [0], [1], [0, 0, 1, 1], [], []>} : vector<16x22xf32>, vector<22x16xf32>, vector<16x16xf32> -> vector<16x16xf32>
      %87 = arith.addf %81, %86 : vector<16x16xf32>
      %c1_101 = arith.constant 1 : index
      %c5_102 = arith.constant 5 : index
      %c0_103 = arith.constant 0 : index
      %88 = vector.load %arg5[%c1_101, %c5_102, %c0_103] : memref<2x22x22xf32, #tpu.memory_space<vmem>>, vector<1x16x22xf32>
      %89 = vector.shape_cast %88 : vector<1x16x22xf32> to vector<16x22xf32>
      %c1_104 = arith.constant 1 : index
      %c5_105 = arith.constant 5 : index
      %c0_106 = arith.constant 0 : index
      %c0_107 = arith.constant 0 : index
      %90 = vector.load %arg3[%c1_104, %c5_105, %c0_106, %c0_107] : memref<2x7x22x16xf32, #tpu.memory_space<vmem>>, vector<1x1x22x16xf32>
      %91 = vector.shape_cast %90 : vector<1x1x22x16xf32> to vector<22x16xf32>
      %cst_108 = arith.constant dense<0.000000e+00> : vector<16x16xf32>
      %92 = tpu.matmul %89, %91, %cst_108 {dimension_numbers = #tpu.dot_dimension_numbers<[1], [0], [0], [1], [0, 0, 1, 1], [], []>} : vector<16x22xf32>, vector<22x16xf32>, vector<16x16xf32> -> vector<16x16xf32>
      %93 = arith.addf %87, %92 : vector<16x16xf32>
      %c1_109 = arith.constant 1 : index
      %c6_110 = arith.constant 6 : index
      %c0_111 = arith.constant 0 : index
      %94 = vector.load %arg5[%c1_109, %c6_110, %c0_111] : memref<2x22x22xf32, #tpu.memory_space<vmem>>, vector<1x16x22xf32>
      %95 = vector.shape_cast %94 : vector<1x16x22xf32> to vector<16x22xf32>
      %c1_112 = arith.constant 1 : index
      %c6_113 = arith.constant 6 : index
      %c0_114 = arith.constant 0 : index
      %c0_115 = arith.constant 0 : index
      %96 = vector.load %arg3[%c1_112, %c6_113, %c0_114, %c0_115] : memref<2x7x22x16xf32, #tpu.memory_space<vmem>>, vector<1x1x22x16xf32>
      %97 = vector.shape_cast %96 : vector<1x1x22x16xf32> to vector<22x16xf32>
      %cst_116 = arith.constant dense<0.000000e+00> : vector<16x16xf32>
      %98 = tpu.matmul %95, %97, %cst_116 {dimension_numbers = #tpu.dot_dimension_numbers<[1], [0], [0], [1], [0, 0, 1, 1], [], []>} : vector<16x22xf32>, vector<22x16xf32>, vector<16x16xf32> -> vector<16x16xf32>
      %99 = arith.addf %93, %98 : vector<16x16xf32>
      %cst_117 = arith.constant 0.000000e+00 : f32
      %100 = vector.broadcast %cst_117 : f32 to vector<16x16xf32>
      %101 = arith.subf %100, %99 : vector<16x16xf32>
      %102 = math.exp %101 : vector<16x16xf32>
      %cst_118 = arith.constant 1.000000e+00 : f32
      %103 = vector.broadcast %cst_118 : f32 to vector<16x16xf32>
      %104 = arith.addf %103, %102 : vector<16x16xf32>
      %105 = tpu.reciprocal %104 {approx = true} : vector<16x16xf32> -> vector<16x16xf32>
      %c0_119 = arith.constant 0 : index
      %c0_120 = arith.constant 0 : index
      %c0_121 = arith.constant 0 : index
      %c0_122 = arith.constant 0 : index
      %106 = vector.load %arg4[%c0_119, %c0_120, %c0_121, %c0_122] : memref<1x1x16x16xf32, #tpu.memory_space<vmem>>, vector<1x1x16x16xf32>
      %107 = vector.shape_cast %106 : vector<1x1x16x16xf32> to vector<16x16xf32>
      %108 = vector.shape_cast %105 : vector<16x16xf32> to vector<1x1x16x16xf32>
      tpu.vector_store %arg4[%c0_119, %c0_120, %c0_121, %c0_122], %108 {strides = array<i32>} : memref<1x1x16x16xf32, #tpu.memory_space<vmem>>, vector<1x1x16x16xf32>,
    } else {
    }
    return
  }
  func.func @transform_0(%arg0: i32, %arg1: i32) -> (i32, i32, i32, i32) {
    %c0_i32 = arith.constant 0 : i32
    %c0_i32_0 = arith.constant 0 : i32
    %c0_i32_1 = arith.constant 0 : i32
    return %arg0, %arg1, %c0_i32, %c0_i32_0 : i32, i32, i32, i32
  }
  func.func @transform_1(%arg0: i32, %arg1: i32) -> (i32, i32, i32, i32) {
    %c0_i32 = arith.constant 0 : i32
    %c0_i32_0 = arith.constant 0 : i32
    %c0_i32_1 = arith.constant 0 : i32
    %c0_i32_2 = arith.constant 0 : i32
    %c0_i32_3 = arith.constant 0 : i32
    return %c0_i32, %c0_i32_0, %c0_i32_1, %c0_i32_2 : i32, i32, i32, i32
  }
  func.func @transform_2(%arg0: i32, %arg1: i32) -> (i32, i32, i32, i32) {
    %c0_i32 = arith.constant 0 : i32
    %c0_i32_0 = arith.constant 0 : i32
    %c0_i32_1 = arith.constant 0 : i32
    %c0_i32_2 = arith.constant 0 : i32
    return %arg0, %c0_i32, %c0_i32_0, %c0_i32_1 : i32, i32, i32, i32
  }
}

</mosaic_0001>

<llo_original>
// kernel: tpu_custom_call.1
$region0: #{tpu_custom_call.1}
  #allocation0 [shape = 'u32[]', space=smem, size = 0x4, offset = 0x4, fixed_abs, tag = 'smem constant byte address 0x4 - core index']
  #allocation1 [shape = 'u32[144,128]{1,0:T(1,128)}', space=vmem, size = 0x12000, scoped, tag = 'internal scratch']
  #allocation2 [shape = 'f32[2,22,22]{2,1,0:T(8,128)}', space=vmem, size = 0x6000, scoped, tag = 'scratch operand']
  %s0 = inlined_call_operand.vmem [shape: f32[2,4,16,16], index: 0, kind: input, shape index: {}]
  %s1 = inlined_call_operand.vmem [shape: f32[2,7,22,16], index: 1, kind: input, shape index: {}]
  %s2 = inlined_call_operand.hbm [shape: f32[2,1,16,16], index: 2, kind: output, shape index: {}]
  %s3 = sld [smem:[#allocation0]]
  $region53: #{tpu_custom_call.1} parent=0
    _
  %s5 = ssub.s32 1, %s3
  %s6 = scalar_select 0, %s5, %s3
  $region1: #{tpu_custom_call.1} parent=0
    #allocation3 [shape = 'u8[16384]{0}', space=vmem, size = 0x4000, scoped, tag = 'output window, operand 0']
    #allocation4 [shape = 's32[2]{0}', space=sflag, size = 0x8, scoped, tag = 'scoped memory for tpu_custom_call.1']
    %7 = vsyncpa [#allocation4], 0
    %s8 = scalar_lea.sflag [#allocation4], 1
    %9 = vsyncpa %s8, 0
    loop: start=0, step=1, limit=6
    $region2: #{tpu_custom_call.1} parent=1 // loop_pre_header
      _
    $region3: #{tpu_custom_call.1} parent=1 // loop_header
      %s11 = sphi 0, %s15
      %p12 = scmp.ge.s32.totalorder %s11, 6
      %s18 = sphi 0, %s30
      %s19 = sphi 0, %s26
      %s20 = sphi 0, %s18
      %s21 = sphi 0, %s19
      %s22 = sphi 0, %s20
      %s23 = sphi 0, %s21
      %s35 = sphi 0, %s37
      %s38 = sphi 0, %s35
      %s39 = sphi 0, %s38
      %s55 = sphi 0, %s39
      %s59 = sphi 0, %s59
      %s61 = sphi 0, %s59
      %s62 = sphi 0, %s61
      %s76 = sphi 0, %s62
      %s82 = sphi 0, %s84
      %s85 = sphi 0, %s82
      %s86 = sphi 0, %s85
      %s102 = sphi 0, %s86
    $region4: #{tpu_custom_call.1} parent=1 // loop_header_branch
      %14 = sbr.rel (%p12) target = $region8
    $region5: #{tpu_custom_call.1} parent=1 // loop_body
      %s16 = ssub.s32 %s11, 1
      %s17 = ssub.s32 %s11, 2
      %s24 = sadd.s32 1, %s19
      %p25 = scmp.ge.s32.totalorder %s24, 2
      %s26 = scalar_select %p25, 0, %s24
      %s27 = sadd.s32 1, %s18
      %s28 = scalar_select %p25, %s27, %s18
      %p29 = scmp.ge.s32.totalorder %s28, 2
      %s30 = scalar_select %p29, 0, %s28
      %s31 = ssub.s32 %s18, %s30
      %s32 = ssub.s32 %s19, %s26
      %s33 = sor.u32 %s31, %s32
      %p34 = scmp.eq.s32.totalorder %s33, 0
      %s36 = sadd.s32 %s35, 1
      %s37 = scalar_select %p34, %s35, %s36
      %p40 = pneg %p34
      %p41 = scmp.eq.s32.totalorder %s11, 3
      %p42 = por %p40, %p41
      %p43 = scmp.ne.s32.totalorder %s35, %s38
      %p44 = scmp.eq.s32.totalorder %s11, 0
      %p45 = por %p43, %p44
      %p46 = scmp.ne.s32.totalorder %s35, %s38
      %p47 = scmp.eq.s32.totalorder %s16, 3
      %p48 = por %p46, %p47
      %p49 = scmp.ne.s32.totalorder %s38, %s39
      %p50 = scmp.eq.s32.totalorder %s16, 0
      %p51 = por %p49, %p50
      %p52 = scmp.ne.s32.totalorder %s38, %s39
      %p53 = scmp.eq.s32.totalorder %s17, 3
      %p54 = por %p52, %p53
      %p56 = scmp.ne.s32.totalorder %s39, %s55
      %p57 = scmp.eq.s32.totalorder %s17, 0
      %p58 = por %p56, %p57
      %s60 = sadd.s32 %s59, 1
      %p63 = scmp.eq.s32.totalorder %s11, 3
      %p64 = scmp.ne.s32.totalorder %s59, %s61
      %p65 = scmp.eq.s32.totalorder %s11, 0
      %p66 = por %p64, %p65
      %p67 = scmp.ne.s32.totalorder %s59, %s61
      %p68 = scmp.eq.s32.totalorder %s16, 3
      %p69 = por %p67, %p68
      %p70 = scmp.ne.s32.totalorder %s61, %s62
      %p71 = scmp.eq.s32.totalorder %s16, 0
      %p72 = por %p70, %p71
      %p73 = scmp.ne.s32.totalorder %s61, %s62
      %p74 = scmp.eq.s32.totalorder %s17, 3
      %p75 = por %p73, %p74
      %p77 = scmp.ne.s32.totalorder %s62, %s76
      %p78 = scmp.eq.s32.totalorder %s17, 0
      %p79 = por %p77, %p78
      %s80 = ssub.s32 %s18, %s30
      %p81 = scmp.eq.s32.totalorder %s80, 0
      %s83 = sadd.s32 %s82, 1
      %s84 = scalar_select %p81, %s82, %s83
      %p87 = pneg %p81
      %p88 = scmp.eq.s32.totalorder %s11, 3
      %p89 = por %p87, %p88
      %p90 = scmp.ne.s32.totalorder %s82, %s85
      %p91 = scmp.eq.s32.totalorder %s11, 0
      %p92 = por %p90, %p91
      %p93 = scmp.ne.s32.totalorder %s82, %s85
      %p94 = scmp.eq.s32.totalorder %s16, 3
      %p95 = por %p93, %p94
      %p96 = scmp.ne.s32.totalorder %s85, %s86
      %p97 = scmp.eq.s32.totalorder %s16, 0
      %p98 = por %p96, %p97
      %p99 = scmp.ne.s32.totalorder %s85, %s86
      %p100 = scmp.eq.s32.totalorder %s17, 3
      %p101 = por %p99, %p100
      %p103 = scmp.ne.s32.totalorder %s86, %s102
      %p104 = scmp.eq.s32.totalorder %s17, 0
      %p105 = por %p103, %p104
      %p106 = scmp.le.s32.totalorder 1, %s11
      %p107 = scmp.lt.s32.totalorder %s11, 5
      %p108 = pnand %p106, %p107
      %p109 = pneg %p108
      // Predicated region
      $region9: #{tpu_custom_call.1} parent=5 // pred_check
        _
      $region10: #{tpu_custom_call.1} parent=5 // pred_check_branch
        %111 = sbr.rel (%p108) target = $region12
      $region11: #{tpu_custom_call.1} parent=5 // pred_region
        %s112 = ssub.s32 %s11, 1
        // Predicated region
        $region13: #{tpu_custom_call.1} parent=11 // pred_check
          %p113 = pneg %p72
        $region14: #{tpu_custom_call.1} parent=11 // pred_check_branch
          %115 = sbr.rel (%p113) target = $region16
        $region15: #{tpu_custom_call.1} parent=11 // pred_region
          _
        $region16: #{tpu_custom_call.1} parent=11 // pred_fallthru
          _
      $region12: #{tpu_custom_call.1} parent=5 // pred_fallthru
        _
      %p116 = scmp.lt.s32.totalorder %s11, 4
      // Predicated region
      $region17: #{tpu_custom_call.1} parent=5 // pred_check
        %p117 = pneg %p116
      $region18: #{tpu_custom_call.1} parent=5 // pred_check_branch
        %119 = sbr.rel (%p117) target = $region20
      $region19: #{tpu_custom_call.1} parent=5 // pred_region
        // Predicated region
        $region21: #{tpu_custom_call.1} parent=19 // pred_check
          %p120 = pneg %p45
        $region22: #{tpu_custom_call.1} parent=19 // pred_check_branch
          %122 = sbr.rel (%p120) target = $region24
        $region23: #{tpu_custom_call.1} parent=19 // pred_region
          %s123 = smul.u32 2, %s19
          %p124 = scmp.lt.s32.totalorder %s18, 1
          %s125 = scalar_select %p124, %s18, 1
          %p126 = scmp.lt.s32.totalorder %s123, 3
          %s127 = scalar_select %p126, %s123, 3
          %s128 = smul.addr %s127, 2
          %s129 = smul.addr %s125, 8
          %s130 = sadd.s32 %s128, %s129
          %s131 = smul.addr %s130, 8
          %s132 = scalar_lea.vmem %s0, %s131
          %s133 = smul.u32 2, %s19
        $region24: #{tpu_custom_call.1} parent=19 // pred_fallthru
          _
      $region20: #{tpu_custom_call.1} parent=5 // pred_fallthru
        _
      %p134 = scmp.le.s32.totalorder 1, %s11
      %p135 = scmp.lt.s32.totalorder %s11, 5
      %p136 = pnand %p134, %p135
      %p137 = pneg %p136
      // Predicated region
      $region25: #{tpu_custom_call.1} parent=5 // pred_check
        _
      $region26: #{tpu_custom_call.1} parent=5 // pred_check_branch
        %139 = sbr.rel (%p136) target = $region28
      $region27: #{tpu_custom_call.1} parent=5 // pred_region
        %s140 = ssub.s32 %s11, 1
        %s141 = smul.u32 2, %s21
        %p142 = scmp.lt.s32.totalorder %s20, 1
        %s143 = scalar_select %p142, %s20, 1
        %p144 = scmp.lt.s32.totalorder %s141, 3
        %s145 = scalar_select %p144, %s141, 3
        %s146 = smul.addr %s145, 2
        %s147 = smul.addr %s143, 8
        %s148 = sadd.s32 %s146, %s147
        %s149 = smul.addr %s148, 8
        %s150 = scalar_lea.vmem %s0, %s149
        %p151 = pneg %p51
        %p152 = pneg %p48
        %p153 = pneg %p72
        %p154 = pneg %p69
        %p155 = pneg %p98
        %p156 = pneg %p95
        %s157 = sand.u32 %s85, 1
        %s158 = scalar_lea.sflag [#allocation4], %s157
        %s159 = sand.u32 %s85, 1
        %s160 = smul.addr %s159, 16
        %s161 = scalar_lea.vmem [#allocation3], %s160
        %s162 = smul.u32 2, %s21
        %p163 = scmp.lt.s32.totalorder %s20, 1
        %s164 = scalar_select %p163, %s20, 1
        %p165 = scmp.lt.s32.totalorder %s162, 3
        %s166 = scalar_select %p165, %s162, 3
        %s167 = smul.addr %s166, 2
        %s168 = smul.addr %s164, 8
        %s169 = sadd.s32 %s167, %s168
        %s170 = smul.addr %s169, 8
        %s171 = scalar_lea.vmem %s0, %s170
        %s172 = smul.u32 2, %s21
        %v173 = vld [vmem:[%s171] sm:$0xff]
        %v174 = vld [vmem:[%s171 + $0x8] sm:$0xff]
        %s175 = scalar_lea.vmem %s171, 16
        %v176 = vld [vmem:[%s175] sm:$0xff]
        %v177 = vld [vmem:[%s175 + $0x8] sm:$0xff]
        %v178 = vadd.f32 %v173, %v176
        %v179 = vadd.f32 %v174, %v177
        %v180 = vmax.f32 %v173, %v176
        %v181 = vmax.f32 %v174, %v177
        %p182 = scmp.eq.s32.totalorder %s21, 0
        // Predicated region
        $region29: #{tpu_custom_call.1} parent=27 // pred_check
          %p183 = pneg %p182
        $region30: #{tpu_custom_call.1} parent=27 // pred_check_branch
          %185 = sbr.rel (%p183) target = $region32
        $region31: #{tpu_custom_call.1} parent=27 // pred_region
          %vm186 = vcmask 179200
          %187 = vst.msk [vmem:[#allocation2] sm:$0xff] %vm186, 0.0
          %188 = vst.msk [vmem:[#allocation2 + $0x8] sm:$0xff] %vm186, 0.0
          %vm189 = vcmask 177152
          %190 = vst.msk [vmem:[#allocation2 + $0x10] sm:$0x3f] %vm189, 0.0
          %191 = vst.msk [vmem:[#allocation2 + $0x18] sm:$0xff] %vm186, 0.0
          %192 = vst.msk [vmem:[#allocation2 + $0x20] sm:$0xff] %vm186, 0.0
          %193 = vst.msk [vmem:[#allocation2 + $0x28] sm:$0x3f] %vm189, 0.0
          %196 = vrot.lane.b32.xlu0 %v178, 3
          %v197 = vpop.permute.xlu0 %196
          %198 = vrot.lane.b32.xlu0 %v179, 3
          %v199 = vpop.permute.xlu0 %198
          %vm202 = vcmask 154648
          %203 = vst.msk [vmem:[#allocation2 + $0x3] sm:$0xff] %vm202, %v197
          %204 = vst.msk [vmem:[#allocation2 + $0xb] sm:$0xff] %vm202, %v199
          %207 = vrot.lane.b32.xlu0 %v180, 3
          %v208 = vpop.permute.xlu0 %207
          %209 = vrot.lane.b32.xlu0 %v181, 3
          %v210 = vpop.permute.xlu0 %209
          %s213 = scalar_lea.vmem [#allocation2], 24
          %214 = vst.msk [vmem:[%s213 + $0x3] sm:$0xff] %vm202, %v208
          %215 = vst.msk [vmem:[%s213 + $0xb] sm:$0xff] %vm202, %v210
        $region32: #{tpu_custom_call.1} parent=27 // pred_fallthru
          _
        %p216 = scmp.gt.s32.totalorder %s21, 0
        // Predicated region
        $region33: #{tpu_custom_call.1} parent=27 // pred_check
          %p217 = pneg %p216
        $region34: #{tpu_custom_call.1} parent=27 // pred_check_branch
          %219 = sbr.rel (%p217) target = $region36
        $region35: #{tpu_custom_call.1} parent=27 // pred_region
          %v220 = vld [vmem:[#allocation2 + $0x3] sm:$0xff]
          %v221 = vld [vmem:[#allocation2 + $0xb] sm:$0xff]
          %224 = vrot.lane.b32.xlu0 %v178, 3
          %v225 = vpop.permute.xlu0 %224
          %226 = vrot.lane.b32.xlu0 %v179, 3
          %v227 = vpop.permute.xlu0 %226
          %v230 = vadd.f32 %v220, %v225
          %v231 = vadd.f32 %v221, %v227
          %vm232 = vcmask 154648
          %233 = vst.msk [vmem:[#allocation2 + $0x3] sm:$0xff] %vm232, %v230
          %234 = vst.msk [vmem:[#allocation2 + $0xb] sm:$0xff] %vm232, %v231
          %s235 = scalar_lea.vmem [#allocation2], 24
          %v236 = vld [vmem:[%s235 + $0x3] sm:$0xff]
          %v237 = vld [vmem:[%s235 + $0xb] sm:$0xff]
          %240 = vrot.lane.b32.xlu0 %v180, 3
          %v241 = vpop.permute.xlu0 %240
          %242 = vrot.lane.b32.xlu0 %v181, 3
          %v243 = vpop.permute.xlu0 %242
          %v246 = vmax.f32 %v236, %v241
          %v247 = vmax.f32 %v237, %v243
          %248 = vst.msk [vmem:[%s235 + $0x3] sm:$0xff] %vm232, %v246
          %249 = vst.msk [vmem:[%s235 + $0xb] sm:$0xff] %vm232, %v247
        $region36: #{tpu_custom_call.1} parent=27 // pred_fallthru
          _
        %p250 = scmp.eq.s32.totalorder %s21, 1
        // Predicated region
        $region37: #{tpu_custom_call.1} parent=27 // pred_check
          %p251 = pneg %p250
        $region38: #{tpu_custom_call.1} parent=27 // pred_check_branch
          %253 = sbr.rel (%p251) target = $region40
        $region39: #{tpu_custom_call.1} parent=27 // pred_region
          %v254 = vld [vmem:[#allocation2] sm:$0xff]
          %v255 = vld [vmem:[#allocation2 + $0x8] sm:$0xff]
          %v256 = vld [vmem:[%s1] sm:$0xff]
          %v257 = vld [vmem:[%s1 + $0x8] sm:$0xff]
          %v258 = vld [vmem:[%s1 + $0x10] sm:$0x3f]
          %v259 = vld [vmem:[#allocation2 + $0x1] sm:$0xff]
          %v260 = vld [vmem:[#allocation2 + $0x9] sm:$0xff]
          %s261 = scalar_lea.vmem %s1, 24
          %v262 = vld [vmem:[%s261] sm:$0xff]
          %v263 = vld [vmem:[%s261 + $0x8] sm:$0xff]
          %v264 = vld [vmem:[%s261 + $0x10] sm:$0x3f]
          %vm265 = vcmask 179200
          %v267 = vsel %vm265, %v259, 0
          %v270 = vsel %vm265, %v260, 0
          %vm272 = vcmask 1045504
          %v274 = vsel %vm272, %v264, 0
          %276 = vmatprep.subr.mxu0 0.0
          %277 = vmatpush1.msra.mxu0 %v262
          %278 = vmatprep.subr.mxu0 0.0
          %279 = vmatpush1.msra.mxu0 %v263
          %280 = vmatprep.subr.mxu0 0.0
          %281 = vmatpush1.msra.mxu0 %v274
          %282 = vmatprep.subr.mxu0 0.0
          %283 = vmatpush1.msra.mxu0 0.0
          %284 = vmatprep.subr.mxu0 0.0
          %285 = vmatpush1.msra.mxu0 0.0
          %286 = vmatprep.subr.mxu0 0.0
          %287 = vmatpush1.msra.mxu0 0.0
          %288 = vmatprep.subr.mxu0 0.0
          %289 = vmatpush1.msra.mxu0 0.0
          %290 = vmatprep.subr.mxu0 0.0
          %291 = vmatpush1.msra.mxu0 0.0
          %292 = vmatprep.subr.mxu0 0.0
          %293 = vmatpush1.msra.mxu0 0.0
          %294 = vmatprep.subr.mxu0 0.0
          %295 = vmatpush1.msra.mxu0 0.0
          %296 = vmatprep.subr.mxu0 0.0
          %297 = vmatpush1.msra.mxu0 0.0
          %298 = vmatprep.subr.mxu0 0.0
          %299 = vmatpush1.msra.mxu0 0.0
          %300 = vmatprep.subr.mxu0 0.0
          %301 = vmatpush1.msra.mxu0 0.0
          %302 = vmatprep.subr.mxu0 0.0
          %303 = vmatpush1.msra.mxu0 0.0
          %304 = vmatprep.subr.mxu0 0.0
          %305 = vmatpush1.msra.mxu0 0.0
          %306 = vmatprep.subr.mxu0 0.0
          %307 = vmatpush1.msra.mxu0 0.0
          %308 = vmatprep.subr.mxu0 0.0
          %309 = vmatpush1.msra.mxu0 0.0
          %310 = vmatprep.subr.mxu0 0.0
          %311 = vmatpush1.msra.mxu0 0.0
          %312 = vmatprep.subr.mxu0 0.0
          %313 = vmatpush1.msra.mxu0 0.0
          %314 = vmatprep.subr.mxu0 0.0
          %315 = vmatpush1.msra.mxu0 0.0
          %316 = vmatprep.subr.mxu0 0.0
          %317 = vmatpush1.msra.mxu0 0.0
          %318 = vmatprep.subr.mxu0 0.0
          %319 = vmatpush1.msra.mxu0 0.0
          %320 = vmatprep.subr.mxu0 0.0
          %321 = vmatpush1.msra.mxu0 0.0
          %322 = vmatprep.subr.mxu0 0.0
          %323 = vmatpush1.msra.mxu0 0.0
          %324 = vmatprep.subr.mxu0 0.0
          %325 = vmatpush1.msra.mxu0 0.0
          %326 = vmatprep.subr.mxu0 0.0
          %327 = vmatpush1.msra.mxu0 0.0
          %328 = vmatprep.subr.mxu0 0.0
          %329 = vmatpush1.msra.mxu0 0.0
          %330 = vmatprep.subr.mxu0 0.0
          %331 = vmatpush1.msra.mxu0 0.0
          %332 = vmatprep.subr.mxu0 0.0
          %333 = vmatpush1.msra.mxu0 0.0
          %334 = vmatprep.subr.mxu0 0.0
          %335 = vmatpush1.msra.mxu0 0.0
          %336 = vmatprep.subr.mxu0 0.0
          %337 = vmatpush1.msra.mxu0 0.0
          %338 = vmatprep.subr.mxu0 0.0
          %339 = vmatpush1.msra.mxu0 0.0
          %340 = vmatprep.mubr.f32.mxu0 0.0
          %341 = vmatmul.mubr.f32.gmra.mrb[0].mxu0 %v267
          %v342 = vpop.f32.mrb[0].mxu0
          %v343 = vadd.f32 0.0, %v342
          %v344 = vpop.f32.mrb[0].mxu0
          %345 = vmatprep.mubr.f32.mxu0 0.0
          %346 = vmatmul.mubr.f32.gmra.mrb[0].mxu0 %v270
          %v347 = vpop.f32.mrb[0].mxu0
          %v348 = vadd.f32 0.0, %v347
          %v349 = vpop.f32.mrb[0].mxu0
          %350 = vdwg.mxu0
          %v352 = vsel %vm265, %v254, 0
          %v355 = vsel %vm265, %v255, 0
          %v358 = vsel %vm272, %v258, 0
          %360 = vmatprep.subr.mxu0 0.0
          %361 = vmatpush1.msra.mxu0 %v256
          %362 = vmatprep.subr.mxu0 0.0
          %363 = vmatpush1.msra.mxu0 %v257
          %364 = vmatprep.subr.mxu0 0.0
          %365 = vmatpush1.msra.mxu0 %v358
          %366 = vmatprep.subr.mxu0 0.0
          %367 = vmatpush1.msra.mxu0 0.0
          %368 = vmatprep.subr.mxu0 0.0
          %369 = vmatpush1.msra.mxu0 0.0
          %370 = vmatprep.subr.mxu0 0.0
          %371 = vmatpush1.msra.mxu0 0.0
          %372 = vmatprep.subr.mxu0 0.0
          %373 = vmatpush1.msra.mxu0 0.0
          %374 = vmatprep.subr.mxu0 0.0
          %375 = vmatpush1.msra.mxu0 0.0
          %376 = vmatprep.subr.mxu0 0.0
          %377 = vmatpush1.msra.mxu0 0.0
          %378 = vmatprep.subr.mxu0 0.0
          %379 = vmatpush1.msra.mxu0 0.0
          %380 = vmatprep.subr.mxu0 0.0
          %381 = vmatpush1.msra.mxu0 0.0
          %382 = vmatprep.subr.mxu0 0.0
          %383 = vmatpush1.msra.mxu0 0.0
          %384 = vmatprep.subr.mxu0 0.0
          %385 = vmatpush1.msra.mxu0 0.0
          %386 = vmatprep.subr.mxu0 0.0
          %387 = vmatpush1.msra.mxu0 0.0
          %388 = vmatprep.subr.mxu0 0.0
          %389 = vmatpush1.msra.mxu0 0.0
          %390 = vmatprep.subr.mxu0 0.0
          %391 = vmatpush1.msra.mxu0 0.0
          %392 = vmatprep.subr.mxu0 0.0
          %393 = vmatpush1.msra.mxu0 0.0
          %394 = vmatprep.subr.mxu0 0.0
          %395 = vmatpush1.msra.mxu0 0.0
          %396 = vmatprep.subr.mxu0 0.0
          %397 = vmatpush1.msra.mxu0 0.0
          %398 = vmatprep.subr.mxu0 0.0
          %399 = vmatpush1.msra.mxu0 0.0
          %400 = vmatprep.subr.mxu0 0.0
          %401 = vmatpush1.msra.mxu0 0.0
          %402 = vmatprep.subr.mxu0 0.0
          %403 = vmatpush1.msra.mxu0 0.0
          %404 = vmatprep.subr.mxu0 0.0
          %405 = vmatpush1.msra.mxu0 0.0
          %406 = vmatprep.subr.mxu0 0.0
          %407 = vmatpush1.msra.mxu0 0.0
          %408 = vmatprep.subr.mxu0 0.0
          %409 = vmatpush1.msra.mxu0 0.0
          %410 = vmatprep.subr.mxu0 0.0
          %411 = vmatpush1.msra.mxu0 0.0
          %412 = vmatprep.subr.mxu0 0.0
          %413 = vmatpush1.msra.mxu0 0.0
          %414 = vmatprep.subr.mxu0 0.0
          %415 = vmatpush1.msra.mxu0 0.0
          %416 = vmatprep.subr.mxu0 0.0
          %417 = vmatpush1.msra.mxu0 0.0
          %418 = vmatprep.subr.mxu0 0.0
          %419 = vmatpush1.msra.mxu0 0.0
          %420 = vmatprep.subr.mxu0 0.0
          %421 = vmatpush1.msra.mxu0 0.0
          %422 = vmatprep.subr.mxu0 0.0
          %423 = vmatpush1.msra.mxu0 0.0
          %424 = vmatprep.mubr.f32.mxu0 0.0
          %425 = vmatmul.mubr.f32.gmra.mrb[0].mxu0 %v352
          %v426 = vpop.f32.mrb[0].mxu0
          %v427 = vadd.f32 %v343, %v426
          %v428 = vpop.f32.mrb[0].mxu0
          %429 = vmatprep.mubr.f32.mxu0 0.0
          %430 = vmatmul.mubr.f32.gmra.mrb[0].mxu0 %v355
          %v431 = vpop.f32.mrb[0].mxu0
          %v432 = vadd.f32 %v348, %v431
          %v433 = vpop.f32.mrb[0].mxu0
          %434 = vdwg.mxu0
          %v435 = vld [vmem:[#allocation2 + $0x2] sm:$0xff]
          %v436 = vld [vmem:[#allocation2 + $0xa] sm:$0xff]
          %s437 = scalar_lea.vmem %s1, 48
          %v438 = vld [vmem:[%s437] sm:$0xff]
          %v439 = vld [vmem:[%s437 + $0x8] sm:$0xff]
          %v440 = vld [vmem:[%s437 + $0x10] sm:$0x3f]
          %v442 = vsel %vm265, %v435, 0
          %v445 = vsel %vm265, %v436, 0
          %v448 = vsel %vm272, %v440, 0
          %450 = vmatprep.subr.mxu0 0.0
          %451 = vmatpush1.msra.mxu0 %v438
          %452 = vmatprep.subr.mxu0 0.0
          %453 = vmatpush1.msra.mxu0 %v439
          %454 = vmatprep.subr.mxu0 0.0
          %455 = vmatpush1.msra.mxu0 %v448
          %456 = vmatprep.subr.mxu0 0.0
          %457 = vmatpush1.msra.mxu0 0.0
          %458 = vmatprep.subr.mxu0 0.0
          %459 = vmatpush1.msra.mxu0 0.0
          %460 = vmatprep.subr.mxu0 0.0
          %461 = vmatpush1.msra.mxu0 0.0
          %462 = vmatprep.subr.mxu0 0.0
          %463 = vmatpush1.msra.mxu0 0.0
          %464 = vmatprep.subr.mxu0 0.0
          %465 = vmatpush1.msra.mxu0 0.0
          %466 = vmatprep.subr.mxu0 0.0
          %467 = vmatpush1.msra.mxu0 0.0
          %468 = vmatprep.subr.mxu0 0.0
          %469 = vmatpush1.msra.mxu0 0.0
          %470 = vmatprep.subr.mxu0 0.0
          %471 = vmatpush1.msra.mxu0 0.0
          %472 = vmatprep.subr.mxu0 0.0
          %473 = vmatpush1.msra.mxu0 0.0
          %474 = vmatprep.subr.mxu0 0.0
          %475 = vmatpush1.msra.mxu0 0.0
          %476 = vmatprep.subr.mxu0 0.0
          %477 = vmatpush1.msra.mxu0 0.0
          %478 = vmatprep.subr.mxu0 0.0
          %479 = vmatpush1.msra.mxu0 0.0
          %480 = vmatprep.subr.mxu0 0.0
          %481 = vmatpush1.msra.mxu0 0.0
          %482 = vmatprep.subr.mxu0 0.0
          %483 = vmatpush1.msra.mxu0 0.0
          %484 = vmatprep.subr.mxu0 0.0
          %485 = vmatpush1.msra.mxu0 0.0
          %486 = vmatprep.subr.mxu0 0.0
          %487 = vmatpush1.msra.mxu0 0.0
          %488 = vmatprep.subr.mxu0 0.0
          %489 = vmatpush1.msra.mxu0 0.0
          %490 = vmatprep.subr.mxu0 0.0
          %491 = vmatpush1.msra.mxu0 0.0
          %492 = vmatprep.subr.mxu0 0.0
          %493 = vmatpush1.msra.mxu0 0.0
          %494 = vmatprep.subr.mxu0 0.0
          %495 = vmatpush1.msra.mxu0 0.0
          %496 = vmatprep.subr.mxu0 0.0
          %497 = vmatpush1.msra.mxu0 0.0
          %498 = vmatprep.subr.mxu0 0.0
          %499 = vmatpush1.msra.mxu0 0.0
          %500 = vmatprep.subr.mxu0 0.0
          %501 = vmatpush1.msra.mxu0 0.0
          %502 = vmatprep.subr.mxu0 0.0
          %503 = vmatpush1.msra.mxu0 0.0
          %504 = vmatprep.subr.mxu0 0.0
          %505 = vmatpush1.msra.mxu0 0.0
          %506 = vmatprep.subr.mxu0 0.0
          %507 = vmatpush1.msra.mxu0 0.0
          %508 = vmatprep.subr.mxu0 0.0
          %509 = vmatpush1.msra.mxu0 0.0
          %510 = vmatprep.subr.mxu0 0.0
          %511 = vmatpush1.msra.mxu0 0.0
          %512 = vmatprep.subr.mxu0 0.0
          %513 = vmatpush1.msra.mxu0 0.0
          %514 = vmatprep.mubr.f32.mxu0 0.0
          %515 = vmatmul.mubr.f32.gmra.mrb[0].mxu0 %v442
          %v516 = vpop.f32.mrb[0].mxu0
          %v517 = vadd.f32 0.0, %v516
          %v518 = vpop.f32.mrb[0].mxu0
          %519 = vmatprep.mubr.f32.mxu0 0.0
          %520 = vmatmul.mubr.f32.gmra.mrb[0].mxu0 %v445
          %v521 = vpop.f32.mrb[0].mxu0
          %v522 = vadd.f32 0.0, %v521
          %v523 = vpop.f32.mrb[0].mxu0
          %524 = vdwg.mxu0
          %v525 = vadd.f32 %v427, %v517
          %v526 = vadd.f32 %v432, %v522
          %v527 = vld [vmem:[#allocation2 + $0x3] sm:$0xff]
          %v528 = vld [vmem:[#allocation2 + $0xb] sm:$0xff]
          %s529 = scalar_lea.vmem %s1, 72
          %v530 = vld [vmem:[%s529] sm:$0xff]
          %v531 = vld [vmem:[%s529 + $0x8] sm:$0xff]
          %v532 = vld [vmem:[%s529 + $0x10] sm:$0x3f]
          %v534 = vsel %vm265, %v527, 0
          %v537 = vsel %vm265, %v528, 0
          %v540 = vsel %vm272, %v532, 0
          %542 = vmatprep.subr.mxu0 0.0
          %543 = vmatpush1.msra.mxu0 %v530
          %544 = vmatprep.subr.mxu0 0.0
          %545 = vmatpush1.msra.mxu0 %v531
          %546 = vmatprep.subr.mxu0 0.0
          %547 = vmatpush1.msra.mxu0 %v540
          %548 = vmatprep.subr.mxu0 0.0
          %549 = vmatpush1.msra.mxu0 0.0
          %550 = vmatprep.subr.mxu0 0.0
          %551 = vmatpush1.msra.mxu0 0.0
          %552 = vmatprep.subr.mxu0 0.0
          %553 = vmatpush1.msra.mxu0 0.0
          %554 = vmatprep.subr.mxu0 0.0
          %555 = vmatpush1.msra.mxu0 0.0
          %556 = vmatprep.subr.mxu0 0.0
          %557 = vmatpush1.msra.mxu0 0.0
          %558 = vmatprep.subr.mxu0 0.0
          %559 = vmatpush1.msra.mxu0 0.0
          %560 = vmatprep.subr.mxu0 0.0
          %561 = vmatpush1.msra.mxu0 0.0
          %562 = vmatprep.subr.mxu0 0.0
          %563 = vmatpush1.msra.mxu0 0.0
          %564 = vmatprep.subr.mxu0 0.0
          %565 = vmatpush1.msra.mxu0 0.0
          %566 = vmatprep.subr.mxu0 0.0
          %567 = vmatpush1.msra.mxu0 0.0
          %568 = vmatprep.subr.mxu0 0.0
          %569 = vmatpush1.msra.mxu0 0.0
          %570 = vmatprep.subr.mxu0 0.0
          %571 = vmatpush1.msra.mxu0 0.0
          %572 = vmatprep.subr.mxu0 0.0
          %573 = vmatpush1.msra.mxu0 0.0
          %574 = vmatprep.subr.mxu0 0.0
          %575 = vmatpush1.msra.mxu0 0.0
          %576 = vmatprep.subr.mxu0 0.0
          %577 = vmatpush1.msra.mxu0 0.0
          %578 = vmatprep.subr.mxu0 0.0
          %579 = vmatpush1.msra.mxu0 0.0
          %580 = vmatprep.subr.mxu0 0.0
          %581 = vmatpush1.msra.mxu0 0.0
          %582 = vmatprep.subr.mxu0 0.0
          %583 = vmatpush1.msra.mxu0 0.0
          %584 = vmatprep.subr.mxu0 0.0
          %585 = vmatpush1.msra.mxu0 0.0
          %586 = vmatprep.subr.mxu0 0.0
          %587 = vmatpush1.msra.mxu0 0.0
          %588 = vmatprep.subr.mxu0 0.0
          %589 = vmatpush1.msra.mxu0 0.0
          %590 = vmatprep.subr.mxu0 0.0
          %591 = vmatpush1.msra.mxu0 0.0
          %592 = vmatprep.subr.mxu0 0.0
          %593 = vmatpush1.msra.mxu0 0.0
          %594 = vmatprep.subr.mxu0 0.0
          %595 = vmatpush1.msra.mxu0 0.0
          %596 = vmatprep.subr.mxu0 0.0
          %597 = vmatpush1.msra.mxu0 0.0
          %598 = vmatprep.subr.mxu0 0.0
          %599 = vmatpush1.msra.mxu0 0.0
          %600 = vmatprep.subr.mxu0 0.0
          %601 = vmatpush1.msra.mxu0 0.0
          %602 = vmatprep.subr.mxu0 0.0
          %603 = vmatpush1.msra.mxu0 0.0
          %604 = vmatprep.subr.mxu0 0.0
          %605 = vmatpush1.msra.mxu0 0.0
          %606 = vmatprep.mubr.f32.mxu0 0.0
          %607 = vmatmul.mubr.f32.gmra.mrb[0].mxu0 %v534
          %v608 = vpop.f32.mrb[0].mxu0
          %v609 = vadd.f32 0.0, %v608
          %v610 = vpop.f32.mrb[0].mxu0
          %611 = vmatprep.mubr.f32.mxu0 0.0
          %612 = vmatmul.mubr.f32.gmra.mrb[0].mxu0 %v537
          %v613 = vpop.f32.mrb[0].mxu0
          %v614 = vadd.f32 0.0, %v613
          %v615 = vpop.f32.mrb[0].mxu0
          %616 = vdwg.mxu0
          %v617 = vadd.f32 %v525, %v609
          %v618 = vadd.f32 %v526, %v614
          %v619 = vld [vmem:[#allocation2 + $0x4] sm:$0xff]
          %v620 = vld [vmem:[#allocation2 + $0xc] sm:$0xff]
          %s621 = scalar_lea.vmem %s1, 96
          %v622 = vld [vmem:[%s621] sm:$0xff]
          %v623 = vld [vmem:[%s621 + $0x8] sm:$0xff]
          %v624 = vld [vmem:[%s621 + $0x10] sm:$0x3f]
          %v626 = vsel %vm265, %v619, 0
          %v629 = vsel %vm265, %v620, 0
          %v632 = vsel %vm272, %v624, 0
          %634 = vmatprep.subr.mxu0 0.0
          %635 = vmatpush1.msra.mxu0 %v622
          %636 = vmatprep.subr.mxu0 0.0
          %637 = vmatpush1.msra.mxu0 %v623
          %638 = vmatprep.subr.mxu0 0.0
          %639 = vmatpush1.msra.mxu0 %v632
          %640 = vmatprep.subr.mxu0 0.0
          %641 = vmatpush1.msra.mxu0 0.0
          %642 = vmatprep.subr.mxu0 0.0
          %643 = vmatpush1.msra.mxu0 0.0
          %644 = vmatprep.subr.mxu0 0.0
          %645 = vmatpush1.msra.mxu0 0.0
          %646 = vmatprep.subr.mxu0 0.0
          %647 = vmatpush1.msra.mxu0 0.0
          %648 = vmatprep.subr.mxu0 0.0
          %649 = vmatpush1.msra.mxu0 0.0
          %650 = vmatprep.subr.mxu0 0.0
          %651 = vmatpush1.msra.mxu0 0.0
          %652 = vmatprep.subr.mxu0 0.0
          %653 = vmatpush1.msra.mxu0 0.0
          %654 = vmatprep.subr.mxu0 0.0
          %655 = vmatpush1.msra.mxu0 0.0
          %656 = vmatprep.subr.mxu0 0.0
          %657 = vmatpush1.msra.mxu0 0.0
          %658 = vmatprep.subr.mxu0 0.0
          %659 = vmatpush1.msra.mxu0 0.0
          %660 = vmatprep.subr.mxu0 0.0
          %661 = vmatpush1.msra.mxu0 0.0
          %662 = vmatprep.subr.mxu0 0.0
          %663 = vmatpush1.msra.mxu0 0.0
          %664 = vmatprep.subr.mxu0 0.0
          %665 = vmatpush1.msra.mxu0 0.0
          %666 = vmatprep.subr.mxu0 0.0
          %667 = vmatpush1.msra.mxu0 0.0
          %668 = vmatprep.subr.mxu0 0.0
          %669 = vmatpush1.msra.mxu0 0.0
          %670 = vmatprep.subr.mxu0 0.0
          %671 = vmatpush1.msra.mxu0 0.0
          %672 = vmatprep.subr.mxu0 0.0
          %673 = vmatpush1.msra.mxu0 0.0
          %674 = vmatprep.subr.mxu0 0.0
          %675 = vmatpush1.msra.mxu0 0.0
          %676 = vmatprep.subr.mxu0 0.0
          %677 = vmatpush1.msra.mxu0 0.0
          %678 = vmatprep.subr.mxu0 0.0
          %679 = vmatpush1.msra.mxu0 0.0
          %680 = vmatprep.subr.mxu0 0.0
          %681 = vmatpush1.msra.mxu0 0.0
          %682 = vmatprep.subr.mxu0 0.0
          %683 = vmatpush1.msra.mxu0 0.0
          %684 = vmatprep.subr.mxu0 0.0
          %685 = vmatpush1.msra.mxu0 0.0
          %686 = vmatprep.subr.mxu0 0.0
          %687 = vmatpush1.msra.mxu0 0.0
          %688 = vmatprep.subr.mxu0 0.0
          %689 = vmatpush1.msra.mxu0 0.0
          %690 = vmatprep.subr.mxu0 0.0
          %691 = vmatpush1.msra.mxu0 0.0
          %692 = vmatprep.subr.mxu0 0.0
          %693 = vmatpush1.msra.mxu0 0.0
          %694 = vmatprep.subr.mxu0 0.0
          %695 = vmatpush1.msra.mxu0 0.0
          %696 = vmatprep.subr.mxu0 0.0
          %697 = vmatpush1.msra.mxu0 0.0
          %698 = vmatprep.mubr.f32.mxu0 0.0
          %699 = vmatmul.mubr.f32.gmra.mrb[0].mxu0 %v626
          %v700 = vpop.f32.mrb[0].mxu0
          %v701 = vadd.f32 0.0, %v700
          %v702 = vpop.f32.mrb[0].mxu0
          %703 = vmatprep.mubr.f32.mxu0 0.0
          %704 = vmatmul.mubr.f32.gmra.mrb[0].mxu0 %v629
          %v705 = vpop.f32.mrb[0].mxu0
          %v706 = vadd.f32 0.0, %v705
          %v707 = vpop.f32.mrb[0].mxu0
          %708 = vdwg.mxu0
          %v709 = vadd.f32 %v617, %v701
          %v710 = vadd.f32 %v618, %v706
          %v711 = vld [vmem:[#allocation2 + $0x5] sm:$0xff]
          %v712 = vld [vmem:[#allocation2 + $0xd] sm:$0xff]
          %s713 = scalar_lea.vmem %s1, 120
          %v714 = vld [vmem:[%s713] sm:$0xff]
          %v715 = vld [vmem:[%s713 + $0x8] sm:$0xff]
          %v716 = vld [vmem:[%s713 + $0x10] sm:$0x3f]
          %v718 = vsel %vm265, %v711, 0
          %v721 = vsel %vm265, %v712, 0
          %v724 = vsel %vm272, %v716, 0
          %726 = vmatprep.subr.mxu0 0.0
          %727 = vmatpush1.msra.mxu0 %v714
          %728 = vmatprep.subr.mxu0 0.0
          %729 = vmatpush1.msra.mxu0 %v715
          %730 = vmatprep.subr.mxu0 0.0
          %731 = vmatpush1.msra.mxu0 %v724
          %732 = vmatprep.subr.mxu0 0.0
          %733 = vmatpush1.msra.mxu0 0.0
          %734 = vmatprep.subr.mxu0 0.0
          %735 = vmatpush1.msra.mxu0 0.0
          %736 = vmatprep.subr.mxu0 0.0
          %737 = vmatpush1.msra.mxu0 0.0
          %738 = vmatprep.subr.mxu0 0.0
          %739 = vmatpush1.msra.mxu0 0.0
          %740 = vmatprep.subr.mxu0 0.0
          %741 = vmatpush1.msra.mxu0 0.0
          %742 = vmatprep.subr.mxu0 0.0
          %743 = vmatpush1.msra.mxu0 0.0
          %744 = vmatprep.subr.mxu0 0.0
          %745 = vmatpush1.msra.mxu0 0.0
          %746 = vmatprep.subr.mxu0 0.0
          %747 = vmatpush1.msra.mxu0 0.0
          %748 = vmatprep.subr.mxu0 0.0
          %749 = vmatpush1.msra.mxu0 0.0
          %750 = vmatprep.subr.mxu0 0.0
          %751 = vmatpush1.msra.mxu0 0.0
          %752 = vmatprep.subr.mxu0 0.0
          %753 = vmatpush1.msra.mxu0 0.0
          %754 = vmatprep.subr.mxu0 0.0
          %755 = vmatpush1.msra.mxu0 0.0
          %756 = vmatprep.subr.mxu0 0.0
          %757 = vmatpush1.msra.mxu0 0.0
          %758 = vmatprep.subr.mxu0 0.0
          %759 = vmatpush1.msra.mxu0 0.0
          %760 = vmatprep.subr.mxu0 0.0
          %761 = vmatpush1.msra.mxu0 0.0
          %762 = vmatprep.subr.mxu0 0.0
          %763 = vmatpush1.msra.mxu0 0.0
          %764 = vmatprep.subr.mxu0 0.0
          %765 = vmatpush1.msra.mxu0 0.0
          %766 = vmatprep.subr.mxu0 0.0
          %767 = vmatpush1.msra.mxu0 0.0
          %768 = vmatprep.subr.mxu0 0.0
          %769 = vmatpush1.msra.mxu0 0.0
          %770 = vmatprep.subr.mxu0 0.0
          %771 = vmatpush1.msra.mxu0 0.0
          %772 = vmatprep.subr.mxu0 0.0
          %773 = vmatpush1.msra.mxu0 0.0
          %774 = vmatprep.subr.mxu0 0.0
          %775 = vmatpush1.msra.mxu0 0.0
          %776 = vmatprep.subr.mxu0 0.0
          %777 = vmatpush1.msra.mxu0 0.0
          %778 = vmatprep.subr.mxu0 0.0
          %779 = vmatpush1.msra.mxu0 0.0
          %780 = vmatprep.subr.mxu0 0.0
          %781 = vmatpush1.msra.mxu0 0.0
          %782 = vmatprep.subr.mxu0 0.0
          %783 = vmatpush1.msra.mxu0 0.0
          %784 = vmatprep.subr.mxu0 0.0
          %785 = vmatpush1.msra.mxu0 0.0
          %786 = vmatprep.subr.mxu0 0.0
          %787 = vmatpush1.msra.mxu0 0.0
          %788 = vmatprep.subr.mxu0 0.0
          %789 = vmatpush1.msra.mxu0 0.0
          %790 = vmatprep.mubr.f32.mxu0 0.0
          %791 = vmatmul.mubr.f32.gmra.mrb[0].mxu0 %v718
          %v792 = vpop.f32.mrb[0].mxu0
          %v793 = vadd.f32 0.0, %v792
          %v794 = vpop.f32.mrb[0].mxu0
          %795 = vmatprep.mubr.f32.mxu0 0.0
          %796 = vmatmul.mubr.f32.gmra.mrb[0].mxu0 %v721
          %v797 = vpop.f32.mrb[0].mxu0
          %v798 = vadd.f32 0.0, %v797
          %v799 = vpop.f32.mrb[0].mxu0
          %800 = vdwg.mxu0
          %v801 = vadd.f32 %v709, %v793
          %v802 = vadd.f32 %v710, %v798
          %v803 = vld [vmem:[#allocation2 + $0x6] sm:$0xff]
          %v804 = vld [vmem:[#allocation2 + $0xe] sm:$0xff]
          %s805 = scalar_lea.vmem %s1, 144
          %v806 = vld [vmem:[%s805] sm:$0xff]
          %v807 = vld [vmem:[%s805 + $0x8] sm:$0xff]
          %v808 = vld [vmem:[%s805 + $0x10] sm:$0x3f]
          %v810 = vsel %vm265, %v803, 0
          %v813 = vsel %vm265, %v804, 0
          %v816 = vsel %vm272, %v808, 0
          %818 = vmatprep.subr.mxu0 0.0
          %819 = vmatpush1.msra.mxu0 %v806
          %820 = vmatprep.subr.mxu0 0.0
          %821 = vmatpush1.msra.mxu0 %v807
          %822 = vmatprep.subr.mxu0 0.0
          %823 = vmatpush1.msra.mxu0 %v816
          %824 = vmatprep.subr.mxu0 0.0
          %825 = vmatpush1.msra.mxu0 0.0
          %826 = vmatprep.subr.mxu0 0.0
          %827 = vmatpush1.msra.mxu0 0.0
          %828 = vmatprep.subr.mxu0 0.0
          %829 = vmatpush1.msra.mxu0 0.0
          %830 = vmatprep.subr.mxu0 0.0
          %831 = vmatpush1.msra.mxu0 0.0
          %832 = vmatprep.subr.mxu0 0.0
          %833 = vmatpush1.msra.mxu0 0.0
          %834 = vmatprep.subr.mxu0 0.0
          %835 = vmatpush1.msra.mxu0 0.0
          %836 = vmatprep.subr.mxu0 0.0
          %837 = vmatpush1.msra.mxu0 0.0
          %838 = vmatprep.subr.mxu0 0.0
          %839 = vmatpush1.msra.mxu0 0.0
          %840 = vmatprep.subr.mxu0 0.0
          %841 = vmatpush1.msra.mxu0 0.0
          %842 = vmatprep.subr.mxu0 0.0
          %843 = vmatpush1.msra.mxu0 0.0
          %844 = vmatprep.subr.mxu0 0.0
          %845 = vmatpush1.msra.mxu0 0.0
          %846 = vmatprep.subr.mxu0 0.0
          %847 = vmatpush1.msra.mxu0 0.0
          %848 = vmatprep.subr.mxu0 0.0
          %849 = vmatpush1.msra.mxu0 0.0
          %850 = vmatprep.subr.mxu0 0.0
          %851 = vmatpush1.msra.mxu0 0.0
          %852 = vmatprep.subr.mxu0 0.0
          %853 = vmatpush1.msra.mxu0 0.0
          %854 = vmatprep.subr.mxu0 0.0
          %855 = vmatpush1.msra.mxu0 0.0
          %856 = vmatprep.subr.mxu0 0.0
          %857 = vmatpush1.msra.mxu0 0.0
          %858 = vmatprep.subr.mxu0 0.0
          %859 = vmatpush1.msra.mxu0 0.0
          %860 = vmatprep.subr.mxu0 0.0
          %861 = vmatpush1.msra.mxu0 0.0
          %862 = vmatprep.subr.mxu0 0.0
          %863 = vmatpush1.msra.mxu0 0.0
          %864 = vmatprep.subr.mxu0 0.0
          %865 = vmatpush1.msra.mxu0 0.0
          %866 = vmatprep.subr.mxu0 0.0
          %867 = vmatpush1.msra.mxu0 0.0
          %868 = vmatprep.subr.mxu0 0.0
          %869 = vmatpush1.msra.mxu0 0.0
          %870 = vmatprep.subr.mxu0 0.0
          %871 = vmatpush1.msra.mxu0 0.0
          %872 = vmatprep.subr.mxu0 0.0
          %873 = vmatpush1.msra.mxu0 0.0
          %874 = vmatprep.subr.mxu0 0.0
          %875 = vmatpush1.msra.mxu0 0.0
          %876 = vmatprep.subr.mxu0 0.0
          %877 = vmatpush1.msra.mxu0 0.0
          %878 = vmatprep.subr.mxu0 0.0
          %879 = vmatpush1.msra.mxu0 0.0
          %880 = vmatprep.subr.mxu0 0.0
          %881 = vmatpush1.msra.mxu0 0.0
          %882 = vmatprep.mubr.f32.mxu0 0.0
          %883 = vmatmul.mubr.f32.gmra.mrb[0].mxu0 %v810
          %v884 = vpop.f32.mrb[0].mxu0
          %v885 = vadd.f32 0.0, %v884
          %v886 = vpop.f32.mrb[0].mxu0
          %887 = vmatprep.mubr.f32.mxu0 0.0
          %888 = vmatmul.mubr.f32.gmra.mrb[0].mxu0 %v813
          %v889 = vpop.f32.mrb[0].mxu0
          %v890 = vadd.f32 0.0, %v889
          %v891 = vpop.f32.mrb[0].mxu0
          %892 = vdwg.mxu0
          %v893 = vadd.f32 %v801, %v885
          %v894 = vadd.f32 %v802, %v890
          %s895 = scalar_lea.vmem [#allocation2], 24
          %v896 = vld [vmem:[%s895] sm:$0xff]
          %v897 = vld [vmem:[%s895 + $0x8] sm:$0xff]
          %s898 = scalar_lea.vmem %s1, 168
          %v899 = vld [vmem:[%s898] sm:$0xff]
          %v900 = vld [vmem:[%s898 + $0x8] sm:$0xff]
          %v901 = vld [vmem:[%s898 + $0x10] sm:$0x3f]
          %v903 = vsel %vm265, %v896, 0
          %v906 = vsel %vm265, %v897, 0
          %v909 = vsel %vm272, %v901, 0
          %911 = vmatprep.subr.mxu0 0.0
          %912 = vmatpush1.msra.mxu0 %v899
          %913 = vmatprep.subr.mxu0 0.0
          %914 = vmatpush1.msra.mxu0 %v900
          %915 = vmatprep.subr.mxu0 0.0
          %916 = vmatpush1.msra.mxu0 %v909
          %917 = vmatprep.subr.mxu0 0.0
          %918 = vmatpush1.msra.mxu0 0.0
          %919 = vmatprep.subr.mxu0 0.0
          %920 = vmatpush1.msra.mxu0 0.0
          %921 = vmatprep.subr.mxu0 0.0
          %922 = vmatpush1.msra.mxu0 0.0
          %923 = vmatprep.subr.mxu0 0.0
          %924 = vmatpush1.msra.mxu0 0.0
          %925 = vmatprep.subr.mxu0 0.0
          %926 = vmatpush1.msra.mxu0 0.0
          %927 = vmatprep.subr.mxu0 0.0
          %928 = vmatpush1.msra.mxu0 0.0
          %929 = vmatprep.subr.mxu0 0.0
          %930 = vmatpush1.msra.mxu0 0.0
          %931 = vmatprep.subr.mxu0 0.0
          %932 = vmatpush1.msra.mxu0 0.0
          %933 = vmatprep.subr.mxu0 0.0
          %934 = vmatpush1.msra.mxu0 0.0
          %935 = vmatprep.subr.mxu0 0.0
          %936 = vmatpush1.msra.mxu0 0.0
          %937 = vmatprep.subr.mxu0 0.0
          %938 = vmatpush1.msra.mxu0 0.0
          %939 = vmatprep.subr.mxu0 0.0
          %940 = vmatpush1.msra.mxu0 0.0
          %941 = vmatprep.subr.mxu0 0.0
          %942 = vmatpush1.msra.mxu0 0.0
          %943 = vmatprep.subr.mxu0 0.0
          %944 = vmatpush1.msra.mxu0 0.0
          %945 = vmatprep.subr.mxu0 0.0
          %946 = vmatpush1.msra.mxu0 0.0
          %947 = vmatprep.subr.mxu0 0.0
          %948 = vmatpush1.msra.mxu0 0.0
          %949 = vmatprep.subr.mxu0 0.0
          %950 = vmatpush1.msra.mxu0 0.0
          %951 = vmatprep.subr.mxu0 0.0
          %952 = vmatpush1.msra.mxu0 0.0
          %953 = vmatprep.subr.mxu0 0.0
          %954 = vmatpush1.msra.mxu0 0.0
          %955 = vmatprep.subr.mxu0 0.0
          %956 = vmatpush1.msra.mxu0 0.0
          %957 = vmatprep.subr.mxu0 0.0
          %958 = vmatpush1.msra.mxu0 0.0
          %959 = vmatprep.subr.mxu0 0.0
          %960 = vmatpush1.msra.mxu0 0.0
          %961 = vmatprep.subr.mxu0 0.0
          %962 = vmatpush1.msra.mxu0 0.0
          %963 = vmatprep.subr.mxu0 0.0
          %964 = vmatpush1.msra.mxu0 0.0
          %965 = vmatprep.subr.mxu0 0.0
          %966 = vmatpush1.msra.mxu0 0.0
          %967 = vmatprep.subr.mxu0 0.0
          %968 = vmatpush1.msra.mxu0 0.0
          %969 = vmatprep.subr.mxu0 0.0
          %970 = vmatpush1.msra.mxu0 0.0
          %971 = vmatprep.subr.mxu0 0.0
          %972 = vmatpush1.msra.mxu0 0.0
          %973 = vmatprep.subr.mxu0 0.0
          %974 = vmatpush1.msra.mxu0 0.0
          %975 = vmatprep.mubr.f32.mxu0 0.0
          %976 = vmatmul.mubr.f32.gmra.mrb[0].mxu0 %v903
          %v977 = vpop.f32.mrb[0].mxu0
          %v978 = vadd.f32 0.0, %v977
          %v979 = vpop.f32.mrb[0].mxu0
          %980 = vmatprep.mubr.f32.mxu0 0.0
          %981 = vmatmul.mubr.f32.gmra.mrb[0].mxu0 %v906
          %v982 = vpop.f32.mrb[0].mxu0
          %v983 = vadd.f32 0.0, %v982
          %v984 = vpop.f32.mrb[0].mxu0
          %985 = vdwg.mxu0
          %v986 = vadd.f32 %v893, %v978
          %v987 = vadd.f32 %v894, %v983
          %v988 = vld [vmem:[%s895 + $0x1] sm:$0xff]
          %v989 = vld [vmem:[%s895 + $0x9] sm:$0xff]
          %s990 = scalar_lea.vmem %s1, 192
          %v991 = vld [vmem:[%s990] sm:$0xff]
          %v992 = vld [vmem:[%s990 + $0x8] sm:$0xff]
          %v993 = vld [vmem:[%s990 + $0x10] sm:$0x3f]
          %v995 = vsel %vm265, %v988, 0
          %v998 = vsel %vm265, %v989, 0
          %v1001 = vsel %vm272, %v993, 0
          %1003 = vmatprep.subr.mxu0 0.0
          %1004 = vmatpush1.msra.mxu0 %v991
          %1005 = vmatprep.subr.mxu0 0.0
          %1006 = vmatpush1.msra.mxu0 %v992
          %1007 = vmatprep.subr.mxu0 0.0
          %1008 = vmatpush1.msra.mxu0 %v1001
          %1009 = vmatprep.subr.mxu0 0.0
          %1010 = vmatpush1.msra.mxu0 0.0
          %1011 = vmatprep.subr.mxu0 0.0
          %1012 = vmatpush1.msra.mxu0 0.0
          %1013 = vmatprep.subr.mxu0 0.0
          %1014 = vmatpush1.msra.mxu0 0.0
          %1015 = vmatprep.subr.mxu0 0.0
          %1016 = vmatpush1.msra.mxu0 0.0
          %1017 = vmatprep.subr.mxu0 0.0
          %1018 = vmatpush1.msra.mxu0 0.0
          %1019 = vmatprep.subr.mxu0 0.0
          %1020 = vmatpush1.msra.mxu0 0.0
          %1021 = vmatprep.subr.mxu0 0.0
          %1022 = vmatpush1.msra.mxu0 0.0
          %1023 = vmatprep.subr.mxu0 0.0
          %1024 = vmatpush1.msra.mxu0 0.0
          %1025 = vmatprep.subr.mxu0 0.0
          %1026 = vmatpush1.msra.mxu0 0.0
          %1027 = vmatprep.subr.mxu0 0.0
          %1028 = vmatpush1.msra.mxu0 0.0
          %1029 = vmatprep.subr.mxu0 0.0
          %1030 = vmatpush1.msra.mxu0 0.0
          %1031 = vmatprep.subr.mxu0 0.0
          %1032 = vmatpush1.msra.mxu0 0.0
          %1033 = vmatprep.subr.mxu0 0.0
          %1034 = vmatpush1.msra.mxu0 0.0
          %1035 = vmatprep.subr.mxu0 0.0
          %1036 = vmatpush1.msra.mxu0 0.0
          %1037 = vmatprep.subr.mxu0 0.0
          %1038 = vmatpush1.msra.mxu0 0.0
          %1039 = vmatprep.subr.mxu0 0.0
          %1040 = vmatpush1.msra.mxu0 0.0
          %1041 = vmatprep.subr.mxu0 0.0
          %1042 = vmatpush1.msra.mxu0 0.0
          %1043 = vmatprep.subr.mxu0 0.0
          %1044 = vmatpush1.msra.mxu0 0.0
          %1045 = vmatprep.subr.mxu0 0.0
          %1046 = vmatpush1.msra.mxu0 0.0
          %1047 = vmatprep.subr.mxu0 0.0
          %1048 = vmatpush1.msra.mxu0 0.0
          %1049 = vmatprep.subr.mxu0 0.0
          %1050 = vmatpush1.msra.mxu0 0.0
          %1051 = vmatprep.subr.mxu0 0.0
          %1052 = vmatpush1.msra.mxu0 0.0
          %1053 = vmatprep.subr.mxu0 0.0
          %1054 = vmatpush1.msra.mxu0 0.0
          %1055 = vmatprep.subr.mxu0 0.0
          %1056 = vmatpush1.msra.mxu0 0.0
          %1057 = vmatprep.subr.mxu0 0.0
          %1058 = vmatpush1.msra.mxu0 0.0
          %1059 = vmatprep.subr.mxu0 0.0
          %1060 = vmatpush1.msra.mxu0 0.0
          %1061 = vmatprep.subr.mxu0 0.0
          %1062 = vmatpush1.msra.mxu0 0.0
          %1063 = vmatprep.subr.mxu0 0.0
          %1064 = vmatpush1.msra.mxu0 0.0
          %1065 = vmatprep.subr.mxu0 0.0
          %1066 = vmatpush1.msra.mxu0 0.0
          %1067 = vmatprep.mubr.f32.mxu0 0.0
          %1068 = vmatmul.mubr.f32.gmra.mrb[0].mxu0 %v995
          %v1069 = vpop.f32.mrb[0].mxu0
          %v1070 = vadd.f32 0.0, %v1069
          %v1071 = vpop.f32.mrb[0].mxu0
          %1072 = vmatprep.mubr.f32.mxu0 0.0
          %1073 = vmatmul.mubr.f32.gmra.mrb[0].mxu0 %v998
          %v1074 = vpop.f32.mrb[0].mxu0
          %v1075 = vadd.f32 0.0, %v1074
          %v1076 = vpop.f32.mrb[0].mxu0
          %1077 = vdwg.mxu0
          %v1078 = vadd.f32 %v986, %v1070
          %v1079 = vadd.f32 %v987, %v1075
          %v1080 = vld [vmem:[%s895 + $0x2] sm:$0xff]
          %v1081 = vld [vmem:[%s895 + $0xa] sm:$0xff]
          %s1082 = scalar_lea.vmem %s1, 216
          %v1083 = vld [vmem:[%s1082] sm:$0xff]
          %v1084 = vld [vmem:[%s1082 + $0x8] sm:$0xff]
          %v1085 = vld [vmem:[%s1082 + $0x10] sm:$0x3f]
          %v1087 = vsel %vm265, %v1080, 0
          %v1090 = vsel %vm265, %v1081, 0
          %v1093 = vsel %vm272, %v1085, 0
          %1095 = vmatprep.subr.mxu0 0.0
          %1096 = vmatpush1.msra.mxu0 %v1083
          %1097 = vmatprep.subr.mxu0 0.0
          %1098 = vmatpush1.msra.mxu0 %v1084
          %1099 = vmatprep.subr.mxu0 0.0
          %1100 = vmatpush1.msra.mxu0 %v1093
          %1101 = vmatprep.subr.mxu0 0.0
          %1102 = vmatpush1.msra.mxu0 0.0
          %1103 = vmatprep.subr.mxu0 0.0
          %1104 = vmatpush1.msra.mxu0 0.0
          %1105 = vmatprep.subr.mxu0 0.0
          %1106 = vmatpush1.msra.mxu0 0.0
          %1107 = vmatprep.subr.mxu0 0.0
          %1108 = vmatpush1.msra.mxu0 0.0
          %1109 = vmatprep.subr.mxu0 0.0
          %1110 = vmatpush1.msra.mxu0 0.0
          %1111 = vmatprep.subr.mxu0 0.0
          %1112 = vmatpush1.msra.mxu0 0.0
          %1113 = vmatprep.subr.mxu0 0.0
          %1114 = vmatpush1.msra.mxu0 0.0
          %1115 = vmatprep.subr.mxu0 0.0
          %1116 = vmatpush1.msra.mxu0 0.0
          %1117 = vmatprep.subr.mxu0 0.0
          %1118 = vmatpush1.msra.mxu0 0.0
          %1119 = vmatprep.subr.mxu0 0.0
          %1120 = vmatpush1.msra.mxu0 0.0
          %1121 = vmatprep.subr.mxu0 0.0
          %1122 = vmatpush1.msra.mxu0 0.0
          %1123 = vmatprep.subr.mxu0 0.0
          %1124 = vmatpush1.msra.mxu0 0.0
          %1125 = vmatprep.subr.mxu0 0.0
          %1126 = vmatpush1.msra.mxu0 0.0
          %1127 = vmatprep.subr.mxu0 0.0
          %1128 = vmatpush1.msra.mxu0 0.0
          %1129 = vmatprep.subr.mxu0 0.0
          %1130 = vmatpush1.msra.mxu0 0.0
          %1131 = vmatprep.subr.mxu0 0.0
          %1132 = vmatpush1.msra.mxu0 0.0
          %1133 = vmatprep.subr.mxu0 0.0
          %1134 = vmatpush1.msra.mxu0 0.0
          %1135 = vmatprep.subr.mxu0 0.0
          %1136 = vmatpush1.msra.mxu0 0.0
          %1137 = vmatprep.subr.mxu0 0.0
          %1138 = vmatpush1.msra.mxu0 0.0
          %1139 = vmatprep.subr.mxu0 0.0
          %1140 = vmatpush1.msra.mxu0 0.0
          %1141 = vmatprep.subr.mxu0 0.0
          %1142 = vmatpush1.msra.mxu0 0.0
          %1143 = vmatprep.subr.mxu0 0.0
          %1144 = vmatpush1.msra.mxu0 0.0
          %1145 = vmatprep.subr.mxu0 0.0
          %1146 = vmatpush1.msra.mxu0 0.0
          %1147 = vmatprep.subr.mxu0 0.0
          %1148 = vmatpush1.msra.mxu0 0.0
          %1149 = vmatprep.subr.mxu0 0.0
          %1150 = vmatpush1.msra.mxu0 0.0
          %1151 = vmatprep.subr.mxu0 0.0
          %1152 = vmatpush1.msra.mxu0 0.0
          %1153 = vmatprep.subr.mxu0 0.0
          %1154 = vmatpush1.msra.mxu0 0.0
          %1155 = vmatprep.subr.mxu0 0.0
          %1156 = vmatpush1.msra.mxu0 0.0
          %1157 = vmatprep.subr.mxu0 0.0
          %1158 = vmatpush1.msra.mxu0 0.0
          %1159 = vmatprep.mubr.f32.mxu0 0.0
          %1160 = vmatmul.mubr.f32.gmra.mrb[0].mxu0 %v1087
          %v1161 = vpop.f32.mrb[0].mxu0
          %v1162 = vadd.f32 0.0, %v1161
          %v1163 = vpop.f32.mrb[0].mxu0
          %1164 = vmatprep.mubr.f32.mxu0 0.0
          %1165 = vmatmul.mubr.f32.gmra.mrb[0].mxu0 %v1090
          %v1166 = vpop.f32.mrb[0].mxu0
          %v1167 = vadd.f32 0.0, %v1166
          %v1168 = vpop.f32.mrb[0].mxu0
          %1169 = vdwg.mxu0
          %v1170 = vadd.f32 %v1078, %v1162
          %v1171 = vadd.f32 %v1079, %v1167
          %v1172 = vld [vmem:[%s895 + $0x3] sm:$0xff]
          %v1173 = vld [vmem:[%s895 + $0xb] sm:$0xff]
          %s1174 = scalar_lea.vmem %s1, 240
          %v1175 = vld [vmem:[%s1174] sm:$0xff]
          %v1176 = vld [vmem:[%s1174 + $0x8] sm:$0xff]
          %v1177 = vld [vmem:[%s1174 + $0x10] sm:$0x3f]
          %v1179 = vsel %vm265, %v1172, 0
          %v1182 = vsel %vm265, %v1173, 0
          %v1185 = vsel %vm272, %v1177, 0
          %1187 = vmatprep.subr.mxu0 0.0
          %1188 = vmatpush1.msra.mxu0 %v1175
          %1189 = vmatprep.subr.mxu0 0.0
          %1190 = vmatpush1.msra.mxu0 %v1176
          %1191 = vmatprep.subr.mxu0 0.0
          %1192 = vmatpush1.msra.mxu0 %v1185
          %1193 = vmatprep.subr.mxu0 0.0
          %1194 = vmatpush1.msra.mxu0 0.0
          %1195 = vmatprep.subr.mxu0 0.0
          %1196 = vmatpush1.msra.mxu0 0.0
          %1197 = vmatprep.subr.mxu0 0.0
          %1198 = vmatpush1.msra.mxu0 0.0
          %1199 = vmatprep.subr.mxu0 0.0
          %1200 = vmatpush1.msra.mxu0 0.0
          %1201 = vmatprep.subr.mxu0 0.0
          %1202 = vmatpush1.msra.mxu0 0.0
          %1203 = vmatprep.subr.mxu0 0.0
          %1204 = vmatpush1.msra.mxu0 0.0
          %1205 = vmatprep.subr.mxu0 0.0
          %1206 = vmatpush1.msra.mxu0 0.0
          %1207 = vmatprep.subr.mxu0 0.0
          %1208 = vmatpush1.msra.mxu0 0.0
          %1209 = vmatprep.subr.mxu0 0.0
          %1210 = vmatpush1.msra.mxu0 0.0
          %1211 = vmatprep.subr.mxu0 0.0
          %1212 = vmatpush1.msra.mxu0 0.0
          %1213 = vmatprep.subr.mxu0 0.0
          %1214 = vmatpush1.msra.mxu0 0.0
          %1215 = vmatprep.subr.mxu0 0.0
          %1216 = vmatpush1.msra.mxu0 0.0
          %1217 = vmatprep.subr.mxu0 0.0
          %1218 = vmatpush1.msra.mxu0 0.0
          %1219 = vmatprep.subr.mxu0 0.0
          %1220 = vmatpush1.msra.mxu0 0.0
          %1221 = vmatprep.subr.mxu0 0.0
          %1222 = vmatpush1.msra.mxu0 0.0
          %1223 = vmatprep.subr.mxu0 0.0
          %1224 = vmatpush1.msra.mxu0 0.0
          %1225 = vmatprep.subr.mxu0 0.0
          %1226 = vmatpush1.msra.mxu0 0.0
          %1227 = vmatprep.subr.mxu0 0.0
          %1228 = vmatpush1.msra.mxu0 0.0
          %1229 = vmatprep.subr.mxu0 0.0
          %1230 = vmatpush1.msra.mxu0 0.0
          %1231 = vmatprep.subr.mxu0 0.0
          %1232 = vmatpush1.msra.mxu0 0.0
          %1233 = vmatprep.subr.mxu0 0.0
          %1234 = vmatpush1.msra.mxu0 0.0
          %1235 = vmatprep.subr.mxu0 0.0
          %1236 = vmatpush1.msra.mxu0 0.0
          %1237 = vmatprep.subr.mxu0 0.0
          %1238 = vmatpush1.msra.mxu0 0.0
          %1239 = vmatprep.subr.mxu0 0.0
          %1240 = vmatpush1.msra.mxu0 0.0
          %1241 = vmatprep.subr.mxu0 0.0
          %1242 = vmatpush1.msra.mxu0 0.0
          %1243 = vmatprep.subr.mxu0 0.0
          %1244 = vmatpush1.msra.mxu0 0.0
          %1245 = vmatprep.subr.mxu0 0.0
          %1246 = vmatpush1.msra.mxu0 0.0
          %1247 = vmatprep.subr.mxu0 0.0
          %1248 = vmatpush1.msra.mxu0 0.0
          %1249 = vmatprep.subr.mxu0 0.0
          %1250 = vmatpush1.msra.mxu0 0.0
          %1251 = vmatprep.mubr.f32.mxu0 0.0
          %1252 = vmatmul.mubr.f32.gmra.mrb[0].mxu0 %v1179
          %v1253 = vpop.f32.mrb[0].mxu0
          %v1254 = vadd.f32 0.0, %v1253
          %v1255 = vpop.f32.mrb[0].mxu0
          %1256 = vmatprep.mubr.f32.mxu0 0.0
          %1257 = vmatmul.mubr.f32.gmra.mrb[0].mxu0 %v1182
          %v1258 = vpop.f32.mrb[0].mxu0
          %v1259 = vadd.f32 0.0, %v1258
          %v1260 = vpop.f32.mrb[0].mxu0
          %1261 = vdwg.mxu0
          %v1262 = vadd.f32 %v1170, %v1254
          %v1263 = vadd.f32 %v1171, %v1259
          %v1264 = vld [vmem:[%s895 + $0x4] sm:$0xff]
          %v1265 = vld [vmem:[%s895 + $0xc] sm:$0xff]
          %s1266 = scalar_lea.vmem %s1, 264
          %v1267 = vld [vmem:[%s1266] sm:$0xff]
          %v1268 = vld [vmem:[%s1266 + $0x8] sm:$0xff]
          %v1269 = vld [vmem:[%s1266 + $0x10] sm:$0x3f]
          %v1271 = vsel %vm265, %v1264, 0
          %v1274 = vsel %vm265, %v1265, 0
          %v1277 = vsel %vm272, %v1269, 0
          %1279 = vmatprep.subr.mxu0 0.0
          %1280 = vmatpush1.msra.mxu0 %v1267
          %1281 = vmatprep.subr.mxu0 0.0
          %1282 = vmatpush1.msra.mxu0 %v1268
          %1283 = vmatprep.subr.mxu0 0.0
          %1284 = vmatpush1.msra.mxu0 %v1277
          %1285 = vmatprep.subr.mxu0 0.0
          %1286 = vmatpush1.msra.mxu0 0.0
          %1287 = vmatprep.subr.mxu0 0.0
          %1288 = vmatpush1.msra.mxu0 0.0
          %1289 = vmatprep.subr.mxu0 0.0
          %1290 = vmatpush1.msra.mxu0 0.0
          %1291 = vmatprep.subr.mxu0 0.0
          %1292 = vmatpush1.msra.mxu0 0.0
          %1293 = vmatprep.subr.mxu0 0.0
          %1294 = vmatpush1.msra.mxu0 0.0
          %1295 = vmatprep.subr.mxu0 0.0
          %1296 = vmatpush1.msra.mxu0 0.0
          %1297 = vmatprep.subr.mxu0 0.0
          %1298 = vmatpush1.msra.mxu0 0.0
          %1299 = vmatprep.subr.mxu0 0.0
          %1300 = vmatpush1.msra.mxu0 0.0
          %1301 = vmatprep.subr.mxu0 0.0
          %1302 = vmatpush1.msra.mxu0 0.0
          %1303 = vmatprep.subr.mxu0 0.0
          %1304 = vmatpush1.msra.mxu0 0.0
          %1305 = vmatprep.subr.mxu0 0.0
          %1306 = vmatpush1.msra.mxu0 0.0
          %1307 = vmatprep.subr.mxu0 0.0
          %1308 = vmatpush1.msra.mxu0 0.0
          %1309 = vmatprep.subr.mxu0 0.0
          %1310 = vmatpush1.msra.mxu0 0.0
          %1311 = vmatprep.subr.mxu0 0.0
          %1312 = vmatpush1.msra.mxu0 0.0
          %1313 = vmatprep.subr.mxu0 0.0
          %1314 = vmatpush1.msra.mxu0 0.0
          %1315 = vmatprep.subr.mxu0 0.0
          %1316 = vmatpush1.msra.mxu0 0.0
          %1317 = vmatprep.subr.mxu0 0.0
          %1318 = vmatpush1.msra.mxu0 0.0
          %1319 = vmatprep.subr.mxu0 0.0
          %1320 = vmatpush1.msra.mxu0 0.0
          %1321 = vmatprep.subr.mxu0 0.0
          %1322 = vmatpush1.msra.mxu0 0.0
          %1323 = vmatprep.subr.mxu0 0.0
          %1324 = vmatpush1.msra.mxu0 0.0
          %1325 = vmatprep.subr.mxu0 0.0
          %1326 = vmatpush1.msra.mxu0 0.0
          %1327 = vmatprep.subr.mxu0 0.0
          %1328 = vmatpush1.msra.mxu0 0.0
          %1329 = vmatprep.subr.mxu0 0.0
          %1330 = vmatpush1.msra.mxu0 0.0
          %1331 = vmatprep.subr.mxu0 0.0
          %1332 = vmatpush1.msra.mxu0 0.0
          %1333 = vmatprep.subr.mxu0 0.0
          %1334 = vmatpush1.msra.mxu0 0.0
          %1335 = vmatprep.subr.mxu0 0.0
          %1336 = vmatpush1.msra.mxu0 0.0
          %1337 = vmatprep.subr.mxu0 0.0
          %1338 = vmatpush1.msra.mxu0 0.0
          %1339 = vmatprep.subr.mxu0 0.0
          %1340 = vmatpush1.msra.mxu0 0.0
          %1341 = vmatprep.subr.mxu0 0.0
          %1342 = vmatpush1.msra.mxu0 0.0
          %1343 = vmatprep.mubr.f32.mxu0 0.0
          %1344 = vmatmul.mubr.f32.gmra.mrb[0].mxu0 %v1271
          %v1345 = vpop.f32.mrb[0].mxu0
          %v1346 = vadd.f32 0.0, %v1345
          %v1347 = vpop.f32.mrb[0].mxu0
          %1348 = vmatprep.mubr.f32.mxu0 0.0
          %1349 = vmatmul.mubr.f32.gmra.mrb[0].mxu0 %v1274
          %v1350 = vpop.f32.mrb[0].mxu0
          %v1351 = vadd.f32 0.0, %v1350
          %v1352 = vpop.f32.mrb[0].mxu0
          %1353 = vdwg.mxu0
          %v1354 = vadd.f32 %v1262, %v1346
          %v1355 = vadd.f32 %v1263, %v1351
          %v1356 = vld [vmem:[%s895 + $0x5] sm:$0xff]
          %v1357 = vld [vmem:[%s895 + $0xd] sm:$0xff]
          %s1358 = scalar_lea.vmem %s1, 288
          %v1359 = vld [vmem:[%s1358] sm:$0xff]
          %v1360 = vld [vmem:[%s1358 + $0x8] sm:$0xff]
          %v1361 = vld [vmem:[%s1358 + $0x10] sm:$0x3f]
          %v1363 = vsel %vm265, %v1356, 0
          %v1366 = vsel %vm265, %v1357, 0
          %v1369 = vsel %vm272, %v1361, 0
          %1371 = vmatprep.subr.mxu0 0.0
          %1372 = vmatpush1.msra.mxu0 %v1359
          %1373 = vmatprep.subr.mxu0 0.0
          %1374 = vmatpush1.msra.mxu0 %v1360
          %1375 = vmatprep.subr.mxu0 0.0
          %1376 = vmatpush1.msra.mxu0 %v1369
          %1377 = vmatprep.subr.mxu0 0.0
          %1378 = vmatpush1.msra.mxu0 0.0
          %1379 = vmatprep.subr.mxu0 0.0
          %1380 = vmatpush1.msra.mxu0 0.0
          %1381 = vmatprep.subr.mxu0 0.0
          %1382 = vmatpush1.msra.mxu0 0.0
          %1383 = vmatprep.subr.mxu0 0.0
          %1384 = vmatpush1.msra.mxu0 0.0
          %1385 = vmatprep.subr.mxu0 0.0
          %1386 = vmatpush1.msra.mxu0 0.0
          %1387 = vmatprep.subr.mxu0 0.0
          %1388 = vmatpush1.msra.mxu0 0.0
          %1389 = vmatprep.subr.mxu0 0.0
          %1390 = vmatpush1.msra.mxu0 0.0
          %1391 = vmatprep.subr.mxu0 0.0
          %1392 = vmatpush1.msra.mxu0 0.0
          %1393 = vmatprep.subr.mxu0 0.0
          %1394 = vmatpush1.msra.mxu0 0.0
          %1395 = vmatprep.subr.mxu0 0.0
          %1396 = vmatpush1.msra.mxu0 0.0
          %1397 = vmatprep.subr.mxu0 0.0
          %1398 = vmatpush1.msra.mxu0 0.0
          %1399 = vmatprep.subr.mxu0 0.0
          %1400 = vmatpush1.msra.mxu0 0.0
          %1401 = vmatprep.subr.mxu0 0.0
          %1402 = vmatpush1.msra.mxu0 0.0
          %1403 = vmatprep.subr.mxu0 0.0
          %1404 = vmatpush1.msra.mxu0 0.0
          %1405 = vmatprep.subr.mxu0 0.0
          %1406 = vmatpush1.msra.mxu0 0.0
          %1407 = vmatprep.subr.mxu0 0.0
          %1408 = vmatpush1.msra.mxu0 0.0
          %1409 = vmatprep.subr.mxu0 0.0
          %1410 = vmatpush1.msra.mxu0 0.0
          %1411 = vmatprep.subr.mxu0 0.0
          %1412 = vmatpush1.msra.mxu0 0.0
          %1413 = vmatprep.subr.mxu0 0.0
          %1414 = vmatpush1.msra.mxu0 0.0
          %1415 = vmatprep.subr.mxu0 0.0
          %1416 = vmatpush1.msra.mxu0 0.0
          %1417 = vmatprep.subr.mxu0 0.0
          %1418 = vmatpush1.msra.mxu0 0.0
          %1419 = vmatprep.subr.mxu0 0.0
          %1420 = vmatpush1.msra.mxu0 0.0
          %1421 = vmatprep.subr.mxu0 0.0
          %1422 = vmatpush1.msra.mxu0 0.0
          %1423 = vmatprep.subr.mxu0 0.0
          %1424 = vmatpush1.msra.mxu0 0.0
          %1425 = vmatprep.subr.mxu0 0.0
          %1426 = vmatpush1.msra.mxu0 0.0
          %1427 = vmatprep.subr.mxu0 0.0
          %1428 = vmatpush1.msra.mxu0 0.0
          %1429 = vmatprep.subr.mxu0 0.0
          %1430 = vmatpush1.msra.mxu0 0.0
          %1431 = vmatprep.subr.mxu0 0.0
          %1432 = vmatpush1.msra.mxu0 0.0
          %1433 = vmatprep.subr.mxu0 0.0
          %1434 = vmatpush1.msra.mxu0 0.0
          %1435 = vmatprep.mubr.f32.mxu0 0.0
          %1436 = vmatmul.mubr.f32.gmra.mrb[0].mxu0 %v1363
          %v1437 = vpop.f32.mrb[0].mxu0
          %v1438 = vadd.f32 0.0, %v1437
          %v1439 = vpop.f32.mrb[0].mxu0
          %1440 = vmatprep.mubr.f32.mxu0 0.0
          %1441 = vmatmul.mubr.f32.gmra.mrb[0].mxu0 %v1366
          %v1442 = vpop.f32.mrb[0].mxu0
          %v1443 = vadd.f32 0.0, %v1442
          %v1444 = vpop.f32.mrb[0].mxu0
          %1445 = vdwg.mxu0
          %v1446 = vadd.f32 %v1354, %v1438
          %v1447 = vadd.f32 %v1355, %v1443
          %v1448 = vld [vmem:[%s895 + $0x6] sm:$0xff]
          %v1449 = vld [vmem:[%s895 + $0xe] sm:$0xff]
          %s1450 = scalar_lea.vmem %s1, 312
          %v1451 = vld [vmem:[%s1450] sm:$0xff]
          %v1452 = vld [vmem:[%s1450 + $0x8] sm:$0xff]
          %v1453 = vld [vmem:[%s1450 + $0x10] sm:$0x3f]
          %v1455 = vsel %vm265, %v1448, 0
          %v1458 = vsel %vm265, %v1449, 0
          %v1461 = vsel %vm272, %v1453, 0
          %1463 = vmatprep.subr.mxu0 0.0
          %1464 = vmatpush1.msra.mxu0 %v1451
          %1465 = vmatprep.subr.mxu0 0.0
          %1466 = vmatpush1.msra.mxu0 %v1452
          %1467 = vmatprep.subr.mxu0 0.0
          %1468 = vmatpush1.msra.mxu0 %v1461
          %1469 = vmatprep.subr.mxu0 0.0
          %1470 = vmatpush1.msra.mxu0 0.0
          %1471 = vmatprep.subr.mxu0 0.0
          %1472 = vmatpush1.msra.mxu0 0.0
          %1473 = vmatprep.subr.mxu0 0.0
          %1474 = vmatpush1.msra.mxu0 0.0
          %1475 = vmatprep.subr.mxu0 0.0
          %1476 = vmatpush1.msra.mxu0 0.0
          %1477 = vmatprep.subr.mxu0 0.0
          %1478 = vmatpush1.msra.mxu0 0.0
          %1479 = vmatprep.subr.mxu0 0.0
          %1480 = vmatpush1.msra.mxu0 0.0
          %1481 = vmatprep.subr.mxu0 0.0
          %1482 = vmatpush1.msra.mxu0 0.0
          %1483 = vmatprep.subr.mxu0 0.0
          %1484 = vmatpush1.msra.mxu0 0.0
          %1485 = vmatprep.subr.mxu0 0.0
          %1486 = vmatpush1.msra.mxu0 0.0
          %1487 = vmatprep.subr.mxu0 0.0
          %1488 = vmatpush1.msra.mxu0 0.0
          %1489 = vmatprep.subr.mxu0 0.0
          %1490 = vmatpush1.msra.mxu0 0.0
          %1491 = vmatprep.subr.mxu0 0.0
          %1492 = vmatpush1.msra.mxu0 0.0
          %1493 = vmatprep.subr.mxu0 0.0
          %1494 = vmatpush1.msra.mxu0 0.0
          %1495 = vmatprep.subr.mxu0 0.0
          %1496 = vmatpush1.msra.mxu0 0.0
          %1497 = vmatprep.subr.mxu0 0.0
          %1498 = vmatpush1.msra.mxu0 0.0
          %1499 = vmatprep.subr.mxu0 0.0
          %1500 = vmatpush1.msra.mxu0 0.0
          %1501 = vmatprep.subr.mxu0 0.0
          %1502 = vmatpush1.msra.mxu0 0.0
          %1503 = vmatprep.subr.mxu0 0.0
          %1504 = vmatpush1.msra.mxu0 0.0
          %1505 = vmatprep.subr.mxu0 0.0
          %1506 = vmatpush1.msra.mxu0 0.0
          %1507 = vmatprep.subr.mxu0 0.0
          %1508 = vmatpush1.msra.mxu0 0.0
          %1509 = vmatprep.subr.mxu0 0.0
          %1510 = vmatpush1.msra.mxu0 0.0
          %1511 = vmatprep.subr.mxu0 0.0
          %1512 = vmatpush1.msra.mxu0 0.0
          %1513 = vmatprep.subr.mxu0 0.0
          %1514 = vmatpush1.msra.mxu0 0.0
          %1515 = vmatprep.subr.mxu0 0.0
          %1516 = vmatpush1.msra.mxu0 0.0
          %1517 = vmatprep.subr.mxu0 0.0
          %1518 = vmatpush1.msra.mxu0 0.0
          %1519 = vmatprep.subr.mxu0 0.0
          %1520 = vmatpush1.msra.mxu0 0.0
          %1521 = vmatprep.subr.mxu0 0.0
          %1522 = vmatpush1.msra.mxu0 0.0
          %1523 = vmatprep.subr.mxu0 0.0
          %1524 = vmatpush1.msra.mxu0 0.0
          %1525 = vmatprep.subr.mxu0 0.0
          %1526 = vmatpush1.msra.mxu0 0.0
          %1527 = vmatprep.mubr.f32.mxu0 0.0
          %1528 = vmatmul.mubr.f32.gmra.mrb[0].mxu0 %v1455
          %v1529 = vpop.f32.mrb[0].mxu0
          %v1530 = vadd.f32 0.0, %v1529
          %v1531 = vpop.f32.mrb[0].mxu0
          %1532 = vmatprep.mubr.f32.mxu0 0.0
          %1533 = vmatmul.mubr.f32.gmra.mrb[0].mxu0 %v1458
          %v1534 = vpop.f32.mrb[0].mxu0
          %v1535 = vadd.f32 0.0, %v1534
          %v1536 = vpop.f32.mrb[0].mxu0
          %1537 = vdwg.mxu0
          %v1538 = vadd.f32 %v1446, %v1530
          %v1539 = vadd.f32 %v1447, %v1535
          %v1540 = vsub.f32 0.0, %v1538
          %v1541 = vsub.f32 0.0, %v1539
          %v1542 = vmul.f32 %v1540, 1.442695
          %v1543 = vpow.pop %v1542
          %v1544 = vmul.f32 %v1541, 1.442695
          %v1545 = vpow.pop %v1544
          %v1546 = vadd.f32 %v1543, 1.0
          %v1547 = vadd.f32 %v1545, 1.0
          %v1548 = vrcp.pop %v1546
          %v1549 = vrcp.pop %v1547
          %vm1550 = vcmask 130048
          %1551 = vst.msk [vmem:[%s161] sm:$0xff] %vm1550, %v1548
          %1552 = vst.msk [vmem:[%s161 + $0x8] sm:$0xff] %vm1550, %v1549
        $region40: #{tpu_custom_call.1} parent=27 // pred_fallthru
          _
        %s1553 = sand.u32 %s85, 1
        %s1554 = scalar_lea.sflag [#allocation4], %s1553
        %s1555 = sand.u32 %s85, 1
        %s1556 = smul.addr %s1555, 16
        %s1557 = scalar_lea.vmem [#allocation3], %s1556
        // Predicated region
        $region41: #{tpu_custom_call.1} parent=27 // pred_check
          %p1558 = pneg %p95
        $region42: #{tpu_custom_call.1} parent=27 // pred_check_branch
          %1560 = sbr.rel (%p1558) target = $region44
        $region43: #{tpu_custom_call.1} parent=27 // pred_region
          %s1562 = ssub.s32 256, 256
          %1563 = vsyncadd %s1554, %s1562
          %s1564 = smul.addr %s20, 2
          %s1565 = smul.addr %s1564, 128
          %s1566 = scalar_lea.hbm %s2, %s1565
          %s1567 = sshll.u32 %s1557, 4
          %s1568 = int_to_ptr.vmem [resolvable:$true] %s1567
          %1573 = dma.vmem_to_hbm [thread:$0]  %s1568, 256, %s1566, %s1554, 128, 128, 8
        $region44: #{tpu_custom_call.1} parent=27 // pred_fallthru
          _
      $region28: #{tpu_custom_call.1} parent=5 // pred_fallthru
        _
      %p1574 = scmp.le.s32.totalorder 2, %s11
      // Predicated region
      $region45: #{tpu_custom_call.1} parent=5 // pred_check
        %p1575 = pneg %p1574
      $region46: #{tpu_custom_call.1} parent=5 // pred_check_branch
        %1577 = sbr.rel (%p1575) target = $region48
      $region47: #{tpu_custom_call.1} parent=5 // pred_region
        %s1578 = ssub.s32 %s11, 2
        // Predicated region
        $region49: #{tpu_custom_call.1} parent=47 // pred_check
          %p1579 = pneg %p101
        $region50: #{tpu_custom_call.1} parent=47 // pred_check_branch
          %1581 = sbr.rel (%p1579) target = $region52
        $region51: #{tpu_custom_call.1} parent=47 // pred_region
          %s1582 = sand.u32 %s86, 1
          %s1583 = scalar_lea.sflag [#allocation4], %s1582
          %s1584 = sand.u32 %s86, 1
          %s1585 = smul.addr %s1584, 16
          %s1586 = scalar_lea.vmem [#allocation3], %s1585
          %1587 = dma.done %s1583, 256
        $region52: #{tpu_custom_call.1} parent=47 // pred_fallthru
          _
      $region48: #{tpu_custom_call.1} parent=5 // pred_fallthru
        _
    $region6: #{tpu_custom_call.1} parent=1 // loop_footer
      %s15 = sadd.s32 1, %s11
    $region7: #{tpu_custom_call.1} parent=1 // loop_footer_branch
      %10 = sbr.rel target = $region3
    $region8: #{tpu_custom_call.1} parent=1 // loop_exit
      _
    %1588 = vsyncpa [#allocation4], 1
    %s1589 = scalar_lea.sflag [#allocation4], 1
    %1590 = vsyncpa %s1589, 1

</llo_original>
